<compile_context>
chip_gen: v5e
topology: v5e:2x2
jax: 0.10.0
libtpu: 0.0.40
codegen_flags: <defaults>
</compile_context>

<pallas_src>
import functools

import jax
import jax.numpy as jnp
from jax.experimental import pallas as pl
from jax.experimental.pallas import tpu as pltpu


def _round_up(x, m):
    return -(-x // m) * m


def lstm_kernel(gates_ref, whh_ref, h0_ref, c0_ref,
                out_ref, hn_ref, cn_ref, *, seq_len, has_pad, unroll):
    """One (batch-block, time-chunk) grid step of the LSTM recurrence.

    gates_ref : (T_BLK, B_BLK, 4*Hp)  precomputed x@W_ih^T + bias, gate-blocked
    whh_ref   : (Hp, 4*Hp)            padded, gate-blocked W_hh^T (resident)
    h0_ref/c0_ref : (B_BLK, Hp)       initial state (read at chunk 0 only)
    out_ref   : (T_BLK, B_BLK, Hp)    hidden states for this chunk (lane-dense)
    hn_ref/cn_ref : (B_BLK, Hp)       recurrent carry, VMEM-resident over chunks
    """
    chunk = pl.program_id(1)
    t_blk = gates_ref.shape[0]
    hp = hn_ref.shape[-1]
    mm_dtype = whh_ref.dtype

    @pl.when(chunk == 0)
    def _():
        hn_ref[...] = h0_ref[...]
        cn_ref[...] = c0_ref[...]

    # Resident recurrent weight as four 128-lane-aligned gate column blocks
    # (hoisted out of the sequential loop).
    w_i = whh_ref[:, 0 * hp:1 * hp]
    w_f = whh_ref[:, 1 * hp:2 * hp]
    w_g = whh_ref[:, 2 * hp:3 * hp]
    w_o = whh_ref[:, 3 * hp:4 * hp]

    t_base = chunk * t_blk

    def step(t, carry):
        h, c = carry
        hs = h.astype(mm_dtype)
        # Four gate-blocked sub-matmuls: the scheduler overlaps the EUP
        # transcendental of gate k with the MXU pushes of gate k+1, and the
        # live gate values stay (B_BLK, Hp) each instead of (B_BLK, 4*Hp).
        i_g = jax.nn.sigmoid(
            gates_ref[t, :, 0 * hp:1 * hp]
            + jnp.dot(hs, w_i, preferred_element_type=jnp.float32))
        f_g = jax.nn.sigmoid(
            gates_ref[t, :, 1 * hp:2 * hp]
            + jnp.dot(hs, w_f, preferred_element_type=jnp.float32))
        g_g = jnp.tanh(
            gates_ref[t, :, 2 * hp:3 * hp]
            + jnp.dot(hs, w_g, preferred_element_type=jnp.float32))
        c_new = f_g * c + i_g * g_g
        tanh_c = jnp.tanh(c_new)          # independent of the o gate
        o_g = jax.nn.sigmoid(
            gates_ref[t, :, 3 * hp:4 * hp]
            + jnp.dot(hs, w_o, preferred_element_type=jnp.float32))
        h_new = o_g * tanh_c
        out_ref[t] = h_new.astype(out_ref.dtype)   # (B_BLK, Hp) unmasked store
        if has_pad:
            # Only emitted when S % T_BLK != 0: padded steps must not advance
            # the carry.  (out rows past seq_len hold garbage; the wrapper
            # slices them away — keep that slice.)
            valid = (t_base + t) < seq_len
            h_new = jnp.where(valid, h_new, h)
            c_new = jnp.where(valid, c_new, c)
        return (h_new, c_new)

    h_fin, c_fin = jax.lax.fori_loop(0, t_blk, step,
                                     (hn_ref[...], cn_ref[...]),
                                     unroll=unroll)
    hn_ref[...] = h_fin
    cn_ref[...] = c_fin


def lstm_pallas(gates_p, w_hh_p, h0_p, c0_p, *, seq_len, t_blk, b_blk,
                vmem_limit_bytes):
    """gates_p: (S_pad, Bp, 4*Hp), w_hh_p: (Hp, 4*Hp), h0_p/c0_p: (Bp, Hp)."""
    s_pad, bp, g4 = gates_p.shape
    hp = g4 // 4
    n_chunks = s_pad // t_blk
    n_bblk = bp // b_blk
    has_pad = (s_pad != seq_len)

    kernel = functools.partial(lstm_kernel, seq_len=seq_len, has_pad=has_pad,
                               unroll=int(min(t_blk, 8)))
    out, hn, cn = pl.pallas_call(
        kernel,
        out_shape=(
            jax.ShapeDtypeStruct((s_pad, bp, hp), jnp.float32),
            jax.ShapeDtypeStruct((bp, hp), jnp.float32),
            jax.ShapeDtypeStruct((bp, hp), jnp.float32),
        ),
        grid_spec=pltpu.PrefetchScalarGridSpec(
            num_scalar_prefetch=0,
            grid=(n_bblk, n_chunks),             # (parallel batch, sequential time)
            in_specs=[
                pl.BlockSpec((t_blk, b_blk, g4), lambda b, i: (i, b, 0)),  # pre-gates
                pl.BlockSpec((hp, g4), lambda b, i: (0, 0)),               # W_hh^T
                pl.BlockSpec((b_blk, hp), lambda b, i: (b, 0)),            # h0
                pl.BlockSpec((b_blk, hp), lambda b, i: (b, 0)),            # c0
            ],
            out_specs=[
                pl.BlockSpec((t_blk, b_blk, hp), lambda b, i: (i, b, 0)),  # outputs
                pl.BlockSpec((b_blk, hp), lambda b, i: (b, 0)),            # h_n carry
                pl.BlockSpec((b_blk, hp), lambda b, i: (b, 0)),            # c_n carry
            ],
        ),
        compiler_params=pltpu.CompilerParams(
            dimension_semantics=("parallel", "arbitrary"),   # recurrence is sequential
            vmem_limit_bytes=vmem_limit_bytes),
    )(gates_p, w_hh_p, h0_p, c0_p)
    return out, hn, cn


def encoder_lstm_forward(params, tokens, hidden_states, *,
                         stream_dtype=jnp.float32, batch_first=True):
    """Mirrors EncoderLSTM.forward: tokens -> emb -> LSTM; returns (out, (h_n, c_n)).

    stream_dtype=jnp.bfloat16 is the recommended production path at realistic H
    (halves HBM/VMEM streams; matmuls still accumulate in f32, gate math f32).
    """
    h0, c0 = hidden_states                          # each (1, B, H)
    B, S = tokens.shape
    E = params["emb"].shape[1]
    H = h0.shape[-1]

    is_bf16 = jnp.dtype(stream_dtype) == jnp.dtype(jnp.bfloat16)
    sub = 16 if is_bf16 else 8                      # sublane tile for the streams
    Bp = _round_up(B, sub)
    Hp = _round_up(H, 128)   # prefer multiples of 256 for bf16 on v6e/v7x MXU

    # Split batch into two 'parallel' blocks when possible so v7x's two
    # TensorCores each get independent sequences; otherwise keep M as large as
    # possible for the tiny-M recurrent matmul.
    nb = 2 if (Bp % (2 * sub) == 0) else 1
    b_blk = Bp // nb

    sb = jnp.dtype(stream_dtype).itemsize           # stream bytes (gates, W_hh)
    ob = 4                                          # out / carry bytes (f32)

    # --- VMEM-budgeted time-chunk (all blocks double-buffered by default) ---
    vmem_budget = 40 * (1 << 20)                    # fits v5e/v6e/v7x with headroom
    fixed = 2 * (Hp * 4 * Hp) * sb                  # W_hh
    fixed += 8 * (b_blk * Hp) * ob                  # h0, c0, hn, cn
    per_t = 2 * b_blk * (4 * Hp * sb + Hp * ob)     # gates block + out block
    t_budget = max(int((vmem_budget - fixed) // per_t), 1)
    t_blk = int(min(S, t_budget, 512))
    s_pad = _round_up(S, t_blk)
    footprint = fixed + per_t * t_blk
    vmem_limit = int(min(max(2 * footprint, 32 * (1 << 20)), 48 * (1 << 20)))
    # (For very large Hp the resident W_hh itself dominates: use bf16 streams
    #  and consider pipeline_mode=pl.Buffered(1) / weight-stationary MXU.)

    # --- JAX glue ------------------------------------------------------------
    # Gate-block + lane-pad the *small* weight/bias before the einsum so the
    # big pre-gate activation comes out already gate-blocked/padded.
    w_ih = params["w_ih"].reshape(4, H, E)
    w_ih = jnp.pad(w_ih, ((0, 0), (0, Hp - H), (0, 0))).reshape(4 * Hp, E)
    bias = (params["b_ih"] + params["b_hh"]).reshape(4, H)
    bias = jnp.pad(bias, ((0, 0), (0, Hp - H))).reshape(4 * Hp)

    x_emb = jnp.take(params["emb"], tokens, axis=0)           # (B, S, E)
    x_sbe = jnp.transpose(x_emb, (1, 0, 2))                   # (S, B, E)
    gates = jnp.einsum("sbe,ge->sbg", x_sbe, w_ih) + bias     # (S, B, 4*Hp)

    gates = jnp.pad(gates, ((0, s_pad - S), (0, Bp - B), (0, 0)))
    gates_p = gates.astype(stream_dtype)

    w_hh = params["w_hh"].T.reshape(H, 4, H)                  # (H, 4, H)
    w_hh = jnp.pad(w_hh, ((0, Hp - H), (0, 0), (0, Hp - H)))
    w_hh_p = w_hh.reshape(Hp, 4 * Hp).astype(stream_dtype)

    # Zero padding of h0/c0/W_hh/gates keeps padded hidden lanes exactly zero
    # through the recurrence; the final [:S, :B, :H] slices rely on this.
    h0_p = jnp.pad(h0[0], ((0, Bp - B), (0, Hp - H))).astype(jnp.float32)
    c0_p = jnp.pad(c0[0], ((0, Bp - B), (0, Hp - H))).astype(jnp.float32)

    out_p, hn_p, cn_p = lstm_pallas(gates_p, w_hh_p, h0_p, c0_p,
                                    seq_len=S, t_blk=t_blk, b_blk=b_blk,
                                    vmem_limit_bytes=vmem_limit)

    out = out_p[:S, :B, :H]                                   # (S, B, H), lane-dense
    if batch_first:
        # PyTorch batch_first=True parity.  Pass batch_first=False to keep the
        # kernel's (S, B, H) layout and fuse this transpose into the consumer.
        out = jnp.transpose(out, (1, 0, 2))
    return out, (hn_p[:B, :H][None], cn_p[:B, :H][None])


def _reference_forward(params, tokens, hidden_states):
    """Pure-JAX reference (lax.scan) for correctness checking."""
    h0, c0 = hidden_states
    x_emb = jnp.take(params["emb"], tokens, axis=0)           # (B, S, E)
    H = h0.shape[-1]
    w_ih_t, w_hh_t = params["w_ih"].T, params["w_hh"].T
    b = params["b_ih"] + params["b_hh"]

    def step(carry, x_t):
        h, c = carry
        g = x_t @ w_ih_t + h @ w_hh_t + b
        i = jax.nn.sigmoid(g[:, 0 * H:1 * H])
        f = jax.nn.sigmoid(g[:, 1 * H:2 * H])
        gg = jnp.tanh(g[:, 2 * H:3 * H])
        o = jax.nn.sigmoid(g[:, 3 * H:4 * H])
        c_new = f * c + i * gg
        h_new = o * jnp.tanh(c_new)
        return (h_new, c_new), h_new

    (hn, cn), ys = jax.lax.scan(step, (h0[0], c0[0]),
                                jnp.transpose(x_emb, (1, 0, 2)))
    return jnp.transpose(ys, (1, 0, 2)), (hn[None], cn[None])


if __name__ == "__main__":
    key = jax.random.PRNGKey(0)
    vocab, E, H = 20, 16, 32      # input_size, embeddings_dims, hidden_size
    B, S = 2, 8                   # batch, sequence length

    ks = jax.random.split(key, 8)
    params = {
        "emb":  jax.random.normal(ks[0], (vocab, E), jnp.float32) * 0.1,
        "w_ih": jax.random.normal(ks[1], (4 * H, E), jnp.float32) * 0.1,
        "w_hh": jax.random.normal(ks[2], (4 * H, H), jnp.float32) * 0.1,
        "b_ih": jax.random.normal(ks[3], (4 * H,), jnp.float32) * 0.1,
        "b_hh": jax.random.normal(ks[4], (4 * H,), jnp.float32) * 0.1,
    }
    tokens = jax.random.randint(ks[5], (B, S), 0, vocab, jnp.int32)
    h0 = jax.random.normal(ks[6], (1, B, H), jnp.float32) * 0.1
    c0 = jax.random.normal(ks[7], (1, B, H), jnp.float32) * 0.1

    ref_out, (ref_hn, ref_cn) = _reference_forward(params, tokens, (h0, c0))

    # f32 streams: tight parity with the pure-JAX f32 reference.
    out, (hn, cn) = encoder_lstm_forward(params, tokens, (h0, c0))
    jax.block_until_ready((out, hn, cn))
    assert jnp.allclose(out, ref_out, atol=1e-5), "f32 output mismatch"
    assert jnp.allclose(hn, ref_hn, atol=1e-5), "f32 h_n mismatch"
    assert jnp.allclose(cn, ref_cn, atol=1e-5), "f32 c_n mismatch"

    # bf16 streams (recommended at realistic H): loose tolerance vs f32 ref.
    out_b, (hn_b, cn_b) = encoder_lstm_forward(params, tokens, (h0, c0),
                                               stream_dtype=jnp.bfloat16)
    jax.block_until_ready((out_b, hn_b, cn_b))
    assert jnp.allclose(out_b, ref_out, atol=3e-2), "bf16 output mismatch"
    assert jnp.allclose(hn_b, ref_hn, atol=3e-2), "bf16 h_n mismatch"
    assert jnp.allclose(cn_b, ref_cn, atol=3e-2), "bf16 c_n mismatch"

    print("KERNEL_OK")
</pallas_src>

<mosaic_0001>
module attributes {stable_mosaic.version = 11 : i64} {
  func.func @lstm_kernel(%arg0: i32, %arg1: i32, %arg2: memref<8x8x512xf32, #tpu.memory_space<vmem>>, %arg3: memref<128x512xf32, #tpu.memory_space<vmem>>, %arg4: memref<8x128xf32, #tpu.memory_space<vmem>>, %arg5: memref<8x128xf32, #tpu.memory_space<vmem>>, %arg6: memref<8x8x128xf32, #tpu.memory_space<vmem>>, %arg7: memref<8x128xf32, #tpu.memory_space<vmem>>, %arg8: memref<8x128xf32, #tpu.memory_space<vmem>>) attributes {dimension_semantics = [#tpu.dimension_semantics<parallel>, #tpu.dimension_semantics<arbitrary>], iteration_bounds = array<i64: 1, 1>, scalar_prefetch = 0 : i64, scratch_operands = 0 : i64, tpu.core_type = #tpu.core_type<tc>, window_params = [{transform_indices = @transform_0, window_bounds = array<i64: 8, 8, 512>}, {pipeline_mode = #tpu.pipeline_mode<synchronous>, transform_indices = @transform_1, window_bounds = array<i64: 128, 512>}, {transform_indices = @transform_2, window_bounds = array<i64: 8, 128>}, {transform_indices = @transform_3, window_bounds = array<i64: 8, 128>}, {transform_indices = @transform_4, window_bounds = array<i64: 8, 8, 128>}, {transform_indices = @transform_5, window_bounds = array<i64: 8, 128>}, {transform_indices = @transform_6, window_bounds = array<i64: 8, 128>}]} {
    %c0_i32 = arith.constant 0 : i32
    %0 = arith.cmpi eq, %arg1, %c0_i32 : i32
    %1 = arith.extui %0 : i1 to i32
    %c0_i32_0 = arith.constant 0 : i32
    %2 = arith.cmpi ne, %1, %c0_i32_0 : i32
    scf.if %2 {
      %c0_149 = arith.constant 0 : index
      %c0_150 = arith.constant 0 : index
      %371 = vector.load %arg4[%c0_149, %c0_150] : memref<8x128xf32, #tpu.memory_space<vmem>>, vector<8x128xf32>
      %c0_151 = arith.constant 0 : index
      %c0_152 = arith.constant 0 : index
      %372 = vector.load %arg7[%c0_151, %c0_152] : memref<8x128xf32, #tpu.memory_space<vmem>>, vector<8x128xf32>
      tpu.vector_store %arg7[%c0_151, %c0_152], %371 {strides = array<i32>} : memref<8x128xf32, #tpu.memory_space<vmem>>, vector<8x128xf32>,
      %c0_153 = arith.constant 0 : index
      %c0_154 = arith.constant 0 : index
      %373 = vector.load %arg5[%c0_153, %c0_154] : memref<8x128xf32, #tpu.memory_space<vmem>>, vector<8x128xf32>
      %c0_155 = arith.constant 0 : index
      %c0_156 = arith.constant 0 : index
      %374 = vector.load %arg8[%c0_155, %c0_156] : memref<8x128xf32, #tpu.memory_space<vmem>>, vector<8x128xf32>
      tpu.vector_store %arg8[%c0_155, %c0_156], %373 {strides = array<i32>} : memref<8x128xf32, #tpu.memory_space<vmem>>, vector<8x128xf32>,
    } else {
    }
    %c0 = arith.constant 0 : index
    %c0_1 = arith.constant 0 : index
    %3 = vector.load %arg3[%c0, %c0_1] : memref<128x512xf32, #tpu.memory_space<vmem>>, vector<128x128xf32>
    %c0_2 = arith.constant 0 : index
    %c128 = arith.constant 128 : index
    %4 = vector.load %arg3[%c0_2, %c128] : memref<128x512xf32, #tpu.memory_space<vmem>>, vector<128x128xf32>
    %c0_3 = arith.constant 0 : index
    %c256 = arith.constant 256 : index
    %5 = vector.load %arg3[%c0_3, %c256] : memref<128x512xf32, #tpu.memory_space<vmem>>, vector<128x128xf32>
    %c0_4 = arith.constant 0 : index
    %c384 = arith.constant 384 : index
    %6 = vector.load %arg3[%c0_4, %c384] : memref<128x512xf32, #tpu.memory_space<vmem>>, vector<128x128xf32>
    %c0_5 = arith.constant 0 : index
    %c0_6 = arith.constant 0 : index
    %7 = vector.load %arg7[%c0_5, %c0_6] : memref<8x128xf32, #tpu.memory_space<vmem>>, vector<8x128xf32>
    %c0_7 = arith.constant 0 : index
    %c0_8 = arith.constant 0 : index
    %8 = vector.load %arg8[%c0_7, %c0_8] : memref<8x128xf32, #tpu.memory_space<vmem>>, vector<8x128xf32>
    %c0_i32_9 = arith.constant 0 : i32
    %9 = arith.index_cast %c0_i32_9 : i32 to index
    %c0_10 = arith.constant 0 : index
    %c0_11 = arith.constant 0 : index
    %10 = vector.load %arg2[%9, %c0_10, %c0_11] : memref<8x8x512xf32, #tpu.memory_space<vmem>>, vector<1x8x128xf32>
    %11 = vector.shape_cast %10 : vector<1x8x128xf32> to vector<8x128xf32>
    %cst = arith.constant dense<0.000000e+00> : vector<8x128xf32>
    %12 = tpu.matmul %7, %3, %cst {dimension_numbers = #tpu.dot_dimension_numbers<[1], [0], [0], [1], [0, 0, 1, 1], [], []>} : vector<8x128xf32>, vector<128x128xf32>, vector<8x128xf32> -> vector<8x128xf32>
    %13 = arith.addf %11, %12 : vector<8x128xf32>
    %14 = arith.negf %13 : vector<8x128xf32>
    %15 = math.exp %14 : vector<8x128xf32>
    %cst_12 = arith.constant 1.000000e+00 : f32
    %16 = vector.broadcast %cst_12 : f32 to vector<8x128xf32>
    %17 = arith.addf %16, %15 : vector<8x128xf32>
    %18 = arith.divf %16, %17 : vector<8x128xf32>
    %19 = arith.index_cast %c0_i32_9 : i32 to index
    %c0_13 = arith.constant 0 : index
    %c128_14 = arith.constant 128 : index
    %20 = vector.load %arg2[%19, %c0_13, %c128_14] : memref<8x8x512xf32, #tpu.memory_space<vmem>>, vector<1x8x128xf32>
    %21 = vector.shape_cast %20 : vector<1x8x128xf32> to vector<8x128xf32>
    %cst_15 = arith.constant dense<0.000000e+00> : vector<8x128xf32>
    %22 = tpu.matmul %7, %4, %cst_15 {dimension_numbers = #tpu.dot_dimension_numbers<[1], [0], [0], [1], [0, 0, 1, 1], [], []>} : vector<8x128xf32>, vector<128x128xf32>, vector<8x128xf32> -> vector<8x128xf32>
    %23 = arith.addf %21, %22 : vector<8x128xf32>
    %24 = arith.negf %23 : vector<8x128xf32>
    %25 = math.exp %24 : vector<8x128xf32>
    %cst_16 = arith.constant 1.000000e+00 : f32
    %26 = vector.broadcast %cst_16 : f32 to vector<8x128xf32>
    %27 = arith.addf %26, %25 : vector<8x128xf32>
    %28 = arith.divf %26, %27 : vector<8x128xf32>
    %29 = arith.index_cast %c0_i32_9 : i32 to index
    %c0_17 = arith.constant 0 : index
    %c256_18 = arith.constant 256 : index
    %30 = vector.load %arg2[%29, %c0_17, %c256_18] : memref<8x8x512xf32, #tpu.memory_space<vmem>>, vector<1x8x128xf32>
    %31 = vector.shape_cast %30 : vector<1x8x128xf32> to vector<8x128xf32>
    %cst_19 = arith.constant dense<0.000000e+00> : vector<8x128xf32>
    %32 = tpu.matmul %7, %5, %cst_19 {dimension_numbers = #tpu.dot_dimension_numbers<[1], [0], [0], [1], [0, 0, 1, 1], [], []>} : vector<8x128xf32>, vector<128x128xf32>, vector<8x128xf32> -> vector<8x128xf32>
    %33 = arith.addf %31, %32 : vector<8x128xf32>
    %34 = math.tanh %33 : vector<8x128xf32>
    %35 = arith.mulf %28, %8 : vector<8x128xf32>
    %36 = arith.mulf %18, %34 : vector<8x128xf32>
    %37 = arith.addf %35, %36 : vector<8x128xf32>
    %38 = math.tanh %37 : vector<8x128xf32>
    %39 = arith.index_cast %c0_i32_9 : i32 to index
    %c0_20 = arith.constant 0 : index
    %c384_21 = arith.constant 384 : index
    %40 = vector.load %arg2[%39, %c0_20, %c384_21] : memref<8x8x512xf32, #tpu.memory_space<vmem>>, vector<1x8x128xf32>
    %41 = vector.shape_cast %40 : vector<1x8x128xf32> to vector<8x128xf32>
    %cst_22 = arith.constant dense<0.000000e+00> : vector<8x128xf32>
    %42 = tpu.matmul %7, %6, %cst_22 {dimension_numbers = #tpu.dot_dimension_numbers<[1], [0], [0], [1], [0, 0, 1, 1], [], []>} : vector<8x128xf32>, vector<128x128xf32>, vector<8x128xf32> -> vector<8x128xf32>
    %43 = arith.addf %41, %42 : vector<8x128xf32>
    %44 = arith.negf %43 : vector<8x128xf32>
    %45 = math.exp %44 : vector<8x128xf32>
    %cst_23 = arith.constant 1.000000e+00 : f32
    %46 = vector.broadcast %cst_23 : f32 to vector<8x128xf32>
    %47 = arith.addf %46, %45 : vector<8x128xf32>
    %48 = arith.divf %46, %47 : vector<8x128xf32>
    %49 = arith.mulf %48, %38 : vector<8x128xf32>
    %50 = arith.index_cast %c0_i32_9 : i32 to index
    %c0_24 = arith.constant 0 : index
    %c0_25 = arith.constant 0 : index
    %51 = vector.load %arg6[%50, %c0_24, %c0_25] : memref<8x8x128xf32, #tpu.memory_space<vmem>>, vector<1x8x128xf32>
    %52 = vector.shape_cast %51 : vector<1x8x128xf32> to vector<8x128xf32>
    %53 = vector.shape_cast %49 : vector<8x128xf32> to vector<1x8x128xf32>
    tpu.vector_store %arg6[%50, %c0_24, %c0_25], %53 {strides = array<i32>} : memref<8x8x128xf32, #tpu.memory_space<vmem>>, vector<1x8x128xf32>,
    %c1_i32 = arith.constant 1 : i32
    %54 = arith.index_cast %c1_i32 : i32 to index
    %c0_26 = arith.constant 0 : index
    %c0_27 = arith.constant 0 : index
    %55 = vector.load %arg2[%54, %c0_26, %c0_27] : memref<8x8x512xf32, #tpu.memory_space<vmem>>, vector<1x8x128xf32>
    %56 = vector.shape_cast %55 : vector<1x8x128xf32> to vector<8x128xf32>
    %cst_28 = arith.constant dense<0.000000e+00> : vector<8x128xf32>
    %57 = tpu.matmul %49, %3, %cst_28 {dimension_numbers = #tpu.dot_dimension_numbers<[1], [0], [0], [1], [0, 0, 1, 1], [], []>} : vector<8x128xf32>, vector<128x128xf32>, vector<8x128xf32> -> vector<8x128xf32>
    %58 = arith.addf %56, %57 : vector<8x128xf32>
    %59 = arith.negf %58 : vector<8x128xf32>
    %60 = math.exp %59 : vector<8x128xf32>
    %cst_29 = arith.constant 1.000000e+00 : f32
    %61 = vector.broadcast %cst_29 : f32 to vector<8x128xf32>
    %62 = arith.addf %61, %60 : vector<8x128xf32>
    %63 = arith.divf %61, %62 : vector<8x128xf32>
    %64 = arith.index_cast %c1_i32 : i32 to index
    %c0_30 = arith.constant 0 : index
    %c128_31 = arith.constant 128 : index
    %65 = vector.load %arg2[%64, %c0_30, %c128_31] : memref<8x8x512xf32, #tpu.memory_space<vmem>>, vector<1x8x128xf32>
    %66 = vector.shape_cast %65 : vector<1x8x128xf32> to vector<8x128xf32>
    %cst_32 = arith.constant dense<0.000000e+00> : vector<8x128xf32>
    %67 = tpu.matmul %49, %4, %cst_32 {dimension_numbers = #tpu.dot_dimension_numbers<[1], [0], [0], [1], [0, 0, 1, 1], [], []>} : vector<8x128xf32>, vector<128x128xf32>, vector<8x128xf32> -> vector<8x128xf32>
    %68 = arith.addf %66, %67 : vector<8x128xf32>
    %69 = arith.negf %68 : vector<8x128xf32>
    %70 = math.exp %69 : vector<8x128xf32>
    %cst_33 = arith.constant 1.000000e+00 : f32
    %71 = vector.broadcast %cst_33 : f32 to vector<8x128xf32>
    %72 = arith.addf %71, %70 : vector<8x128xf32>
    %73 = arith.divf %71, %72 : vector<8x128xf32>
    %74 = arith.index_cast %c1_i32 : i32 to index
    %c0_34 = arith.constant 0 : index
    %c256_35 = arith.constant 256 : index
    %75 = vector.load %arg2[%74, %c0_34, %c256_35] : memref<8x8x512xf32, #tpu.memory_space<vmem>>, vector<1x8x128xf32>
    %76 = vector.shape_cast %75 : vector<1x8x128xf32> to vector<8x128xf32>
    %cst_36 = arith.constant dense<0.000000e+00> : vector<8x128xf32>
    %77 = tpu.matmul %49, %5, %cst_36 {dimension_numbers = #tpu.dot_dimension_numbers<[1], [0], [0], [1], [0, 0, 1, 1], [], []>} : vector<8x128xf32>, vector<128x128xf32>, vector<8x128xf32> -> vector<8x128xf32>
    %78 = arith.addf %76, %77 : vector<8x128xf32>
    %79 = math.tanh %78 : vector<8x128xf32>
    %80 = arith.mulf %73, %37 : vector<8x128xf32>
    %81 = arith.mulf %63, %79 : vector<8x128xf32>
    %82 = arith.addf %80, %81 : vector<8x128xf32>
    %83 = math.tanh %82 : vector<8x128xf32>
    %84 = arith.index_cast %c1_i32 : i32 to index
    %c0_37 = arith.constant 0 : index
    %c384_38 = arith.constant 384 : index
    %85 = vector.load %arg2[%84, %c0_37, %c384_38] : memref<8x8x512xf32, #tpu.memory_space<vmem>>, vector<1x8x128xf32>
    %86 = vector.shape_cast %85 : vector<1x8x128xf32> to vector<8x128xf32>
    %cst_39 = arith.constant dense<0.000000e+00> : vector<8x128xf32>
    %87 = tpu.matmul %49, %6, %cst_39 {dimension_numbers = #tpu.dot_dimension_numbers<[1], [0], [0], [1], [0, 0, 1, 1], [], []>} : vector<8x128xf32>, vector<128x128xf32>, vector<8x128xf32> -> vector<8x128xf32>
    %88 = arith.addf %86, %87 : vector<8x128xf32>
    %89 = arith.negf %88 : vector<8x128xf32>
    %90 = math.exp %89 : vector<8x128xf32>
    %cst_40 = arith.constant 1.000000e+00 : f32
    %91 = vector.broadcast %cst_40 : f32 to vector<8x128xf32>
    %92 = arith.addf %91, %90 : vector<8x128xf32>
    %93 = arith.divf %91, %92 : vector<8x128xf32>
    %94 = arith.mulf %93, %83 : vector<8x128xf32>
    %95 = arith.index_cast %c1_i32 : i32 to index
    %c0_41 = arith.constant 0 : index
    %c0_42 = arith.constant 0 : index
    %96 = vector.load %arg6[%95, %c0_41, %c0_42] : memref<8x8x128xf32, #tpu.memory_space<vmem>>, vector<1x8x128xf32>
    %97 = vector.shape_cast %96 : vector<1x8x128xf32> to vector<8x128xf32>
    %98 = vector.shape_cast %94 : vector<8x128xf32> to vector<1x8x128xf32>
    tpu.vector_store %arg6[%95, %c0_41, %c0_42], %98 {strides = array<i32>} : memref<8x8x128xf32, #tpu.memory_space<vmem>>, vector<1x8x128xf32>,
    %c2_i32 = arith.constant 2 : i32
    %99 = arith.index_cast %c2_i32 : i32 to index
    %c0_43 = arith.constant 0 : index
    %c0_44 = arith.constant 0 : index
    %100 = vector.load %arg2[%99, %c0_43, %c0_44] : memref<8x8x512xf32, #tpu.memory_space<vmem>>, vector<1x8x128xf32>
    %101 = vector.shape_cast %100 : vector<1x8x128xf32> to vector<8x128xf32>
    %cst_45 = arith.constant dense<0.000000e+00> : vector<8x128xf32>
    %102 = tpu.matmul %94, %3, %cst_45 {dimension_numbers = #tpu.dot_dimension_numbers<[1], [0], [0], [1], [0, 0, 1, 1], [], []>} : vector<8x128xf32>, vector<128x128xf32>, vector<8x128xf32> -> vector<8x128xf32>
    %103 = arith.addf %101, %102 : vector<8x128xf32>
    %104 = arith.negf %103 : vector<8x128xf32>
    %105 = math.exp %104 : vector<8x128xf32>
    %cst_46 = arith.constant 1.000000e+00 : f32
    %106 = vector.broadcast %cst_46 : f32 to vector<8x128xf32>
    %107 = arith.addf %106, %105 : vector<8x128xf32>
    %108 = arith.divf %106, %107 : vector<8x128xf32>
    %109 = arith.index_cast %c2_i32 : i32 to index
    %c0_47 = arith.constant 0 : index
    %c128_48 = arith.constant 128 : index
    %110 = vector.load %arg2[%109, %c0_47, %c128_48] : memref<8x8x512xf32, #tpu.memory_space<vmem>>, vector<1x8x128xf32>
    %111 = vector.shape_cast %110 : vector<1x8x128xf32> to vector<8x128xf32>
    %cst_49 = arith.constant dense<0.000000e+00> : vector<8x128xf32>
    %112 = tpu.matmul %94, %4, %cst_49 {dimension_numbers = #tpu.dot_dimension_numbers<[1], [0], [0], [1], [0, 0, 1, 1], [], []>} : vector<8x128xf32>, vector<128x128xf32>, vector<8x128xf32> -> vector<8x128xf32>
    %113 = arith.addf %111, %112 : vector<8x128xf32>
    %114 = arith.negf %113 : vector<8x128xf32>
    %115 = math.exp %114 : vector<8x128xf32>
    %cst_50 = arith.constant 1.000000e+00 : f32
    %116 = vector.broadcast %cst_50 : f32 to vector<8x128xf32>
    %117 = arith.addf %116, %115 : vector<8x128xf32>
    %118 = arith.divf %116, %117 : vector<8x128xf32>
    %119 = arith.index_cast %c2_i32 : i32 to index
    %c0_51 = arith.constant 0 : index
    %c256_52 = arith.constant 256 : index
    %120 = vector.load %arg2[%119, %c0_51, %c256_52] : memref<8x8x512xf32, #tpu.memory_space<vmem>>, vector<1x8x128xf32>
    %121 = vector.shape_cast %120 : vector<1x8x128xf32> to vector<8x128xf32>
    %cst_53 = arith.constant dense<0.000000e+00> : vector<8x128xf32>
    %122 = tpu.matmul %94, %5, %cst_53 {dimension_numbers = #tpu.dot_dimension_numbers<[1], [0], [0], [1], [0, 0, 1, 1], [], []>} : vector<8x128xf32>, vector<128x128xf32>, vector<8x128xf32> -> vector<8x128xf32>
    %123 = arith.addf %121, %122 : vector<8x128xf32>
    %124 = math.tanh %123 : vector<8x128xf32>
    %125 = arith.mulf %118, %82 : vector<8x128xf32>
    %126 = arith.mulf %108, %124 : vector<8x128xf32>
    %127 = arith.addf %125, %126 : vector<8x128xf32>
    %128 = math.tanh %127 : vector<8x128xf32>
    %129 = arith.index_cast %c2_i32 : i32 to index
    %c0_54 = arith.constant 0 : index
    %c384_55 = arith.constant 384 : index
    %130 = vector.load %arg2[%129, %c0_54, %c384_55] : memref<8x8x512xf32, #tpu.memory_space<vmem>>, vector<1x8x128xf32>
    %131 = vector.shape_cast %130 : vector<1x8x128xf32> to vector<8x128xf32>
    %cst_56 = arith.constant dense<0.000000e+00> : vector<8x128xf32>
    %132 = tpu.matmul %94, %6, %cst_56 {dimension_numbers = #tpu.dot_dimension_numbers<[1], [0], [0], [1], [0, 0, 1, 1], [], []>} : vector<8x128xf32>, vector<128x128xf32>, vector<8x128xf32> -> vector<8x128xf32>
    %133 = arith.addf %131, %132 : vector<8x128xf32>
    %134 = arith.negf %133 : vector<8x128xf32>
    %135 = math.exp %134 : vector<8x128xf32>
    %cst_57 = arith.constant 1.000000e+00 : f32
    %136 = vector.broadcast %cst_57 : f32 to vector<8x128xf32>
    %137 = arith.addf %136, %135 : vector<8x128xf32>
    %138 = arith.divf %136, %137 : vector<8x128xf32>
    %139 = arith.mulf %138, %128 : vector<8x128xf32>
    %140 = arith.index_cast %c2_i32 : i32 to index
    %c0_58 = arith.constant 0 : index
    %c0_59 = arith.constant 0 : index
    %141 = vector.load %arg6[%140, %c0_58, %c0_59] : memref<8x8x128xf32, #tpu.memory_space<vmem>>, vector<1x8x128xf32>
    %142 = vector.shape_cast %141 : vector<1x8x128xf32> to vector<8x128xf32>
    %143 = vector.shape_cast %139 : vector<8x128xf32> to vector<1x8x128xf32>
    tpu.vector_store %arg6[%140, %c0_58, %c0_59], %143 {strides = array<i32>} : memref<8x8x128xf32, #tpu.memory_space<vmem>>, vector<1x8x128xf32>,
    %c3_i32 = arith.constant 3 : i32
    %144 = arith.index_cast %c3_i32 : i32 to index
    %c0_60 = arith.constant 0 : index
    %c0_61 = arith.constant 0 : index
    %145 = vector.load %arg2[%144, %c0_60, %c0_61] : memref<8x8x512xf32, #tpu.memory_space<vmem>>, vector<1x8x128xf32>
    %146 = vector.shape_cast %145 : vector<1x8x128xf32> to vector<8x128xf32>
    %cst_62 = arith.constant dense<0.000000e+00> : vector<8x128xf32>
    %147 = tpu.matmul %139, %3, %cst_62 {dimension_numbers = #tpu.dot_dimension_numbers<[1], [0], [0], [1], [0, 0, 1, 1], [], []>} : vector<8x128xf32>, vector<128x128xf32>, vector<8x128xf32> -> vector<8x128xf32>
    %148 = arith.addf %146, %147 : vector<8x128xf32>
    %149 = arith.negf %148 : vector<8x128xf32>
    %150 = math.exp %149 : vector<8x128xf32>
    %cst_63 = arith.constant 1.000000e+00 : f32
    %151 = vector.broadcast %cst_63 : f32 to vector<8x128xf32>
    %152 = arith.addf %151, %150 : vector<8x128xf32>
    %153 = arith.divf %151, %152 : vector<8x128xf32>
    %154 = arith.index_cast %c3_i32 : i32 to index
    %c0_64 = arith.constant 0 : index
    %c128_65 = arith.constant 128 : index
    %155 = vector.load %arg2[%154, %c0_64, %c128_65] : memref<8x8x512xf32, #tpu.memory_space<vmem>>, vector<1x8x128xf32>
    %156 = vector.shape_cast %155 : vector<1x8x128xf32> to vector<8x128xf32>
    %cst_66 = arith.constant dense<0.000000e+00> : vector<8x128xf32>
    %157 = tpu.matmul %139, %4, %cst_66 {dimension_numbers = #tpu.dot_dimension_numbers<[1], [0], [0], [1], [0, 0, 1, 1], [], []>} : vector<8x128xf32>, vector<128x128xf32>, vector<8x128xf32> -> vector<8x128xf32>
    %158 = arith.addf %156, %157 : vector<8x128xf32>
    %159 = arith.negf %158 : vector<8x128xf32>
    %160 = math.exp %159 : vector<8x128xf32>
    %cst_67 = arith.constant 1.000000e+00 : f32
    %161 = vector.broadcast %cst_67 : f32 to vector<8x128xf32>
    %162 = arith.addf %161, %160 : vector<8x128xf32>
    %163 = arith.divf %161, %162 : vector<8x128xf32>
    %164 = arith.index_cast %c3_i32 : i32 to index
    %c0_68 = arith.constant 0 : index
    %c256_69 = arith.constant 256 : index
    %165 = vector.load %arg2[%164, %c0_68, %c256_69] : memref<8x8x512xf32, #tpu.memory_space<vmem>>, vector<1x8x128xf32>
    %166 = vector.shape_cast %165 : vector<1x8x128xf32> to vector<8x128xf32>
    %cst_70 = arith.constant dense<0.000000e+00> : vector<8x128xf32>
    %167 = tpu.matmul %139, %5, %cst_70 {dimension_numbers = #tpu.dot_dimension_numbers<[1], [0], [0], [1], [0, 0, 1, 1], [], []>} : vector<8x128xf32>, vector<128x128xf32>, vector<8x128xf32> -> vector<8x128xf32>
    %168 = arith.addf %166, %167 : vector<8x128xf32>
    %169 = math.tanh %168 : vector<8x128xf32>
    %170 = arith.mulf %163, %127 : vector<8x128xf32>
    %171 = arith.mulf %153, %169 : vector<8x128xf32>
    %172 = arith.addf %170, %171 : vector<8x128xf32>
    %173 = math.tanh %172 : vector<8x128xf32>
    %174 = arith.index_cast %c3_i32 : i32 to index
    %c0_71 = arith.constant 0 : index
    %c384_72 = arith.constant 384 : index
    %175 = vector.load %arg2[%174, %c0_71, %c384_72] : memref<8x8x512xf32, #tpu.memory_space<vmem>>, vector<1x8x128xf32>
    %176 = vector.shape_cast %175 : vector<1x8x128xf32> to vector<8x128xf32>
    %cst_73 = arith.constant dense<0.000000e+00> : vector<8x128xf32>
    %177 = tpu.matmul %139, %6, %cst_73 {dimension_numbers = #tpu.dot_dimension_numbers<[1], [0], [0], [1], [0, 0, 1, 1], [], []>} : vector<8x128xf32>, vector<128x128xf32>, vector<8x128xf32> -> vector<8x128xf32>
    %178 = arith.addf %176, %177 : vector<8x128xf32>
    %179 = arith.negf %178 : vector<8x128xf32>
    %180 = math.exp %179 : vector<8x128xf32>
    %cst_74 = arith.constant 1.000000e+00 : f32
    %181 = vector.broadcast %cst_74 : f32 to vector<8x128xf32>
    %182 = arith.addf %181, %180 : vector<8x128xf32>
    %183 = arith.divf %181, %182 : vector<8x128xf32>
    %184 = arith.mulf %183, %173 : vector<8x128xf32>
    %185 = arith.index_cast %c3_i32 : i32 to index
    %c0_75 = arith.constant 0 : index
    %c0_76 = arith.constant 0 : index
    %186 = vector.load %arg6[%185, %c0_75, %c0_76] : memref<8x8x128xf32, #tpu.memory_space<vmem>>, vector<1x8x128xf32>
    %187 = vector.shape_cast %186 : vector<1x8x128xf32> to vector<8x128xf32>
    %188 = vector.shape_cast %184 : vector<8x128xf32> to vector<1x8x128xf32>
    tpu.vector_store %arg6[%185, %c0_75, %c0_76], %188 {strides = array<i32>} : memref<8x8x128xf32, #tpu.memory_space<vmem>>, vector<1x8x128xf32>,
    %c4_i32 = arith.constant 4 : i32
    %189 = arith.index_cast %c4_i32 : i32 to index
    %c0_77 = arith.constant 0 : index
    %c0_78 = arith.constant 0 : index
    %190 = vector.load %arg2[%189, %c0_77, %c0_78] : memref<8x8x512xf32, #tpu.memory_space<vmem>>, vector<1x8x128xf32>
    %191 = vector.shape_cast %190 : vector<1x8x128xf32> to vector<8x128xf32>
    %cst_79 = arith.constant dense<0.000000e+00> : vector<8x128xf32>
    %192 = tpu.matmul %184, %3, %cst_79 {dimension_numbers = #tpu.dot_dimension_numbers<[1], [0], [0], [1], [0, 0, 1, 1], [], []>} : vector<8x128xf32>, vector<128x128xf32>, vector<8x128xf32> -> vector<8x128xf32>
    %193 = arith.addf %191, %192 : vector<8x128xf32>
    %194 = arith.negf %193 : vector<8x128xf32>
    %195 = math.exp %194 : vector<8x128xf32>
    %cst_80 = arith.constant 1.000000e+00 : f32
    %196 = vector.broadcast %cst_80 : f32 to vector<8x128xf32>
    %197 = arith.addf %196, %195 : vector<8x128xf32>
    %198 = arith.divf %196, %197 : vector<8x128xf32>
    %199 = arith.index_cast %c4_i32 : i32 to index
    %c0_81 = arith.constant 0 : index
    %c128_82 = arith.constant 128 : index
    %200 = vector.load %arg2[%199, %c0_81, %c128_82] : memref<8x8x512xf32, #tpu.memory_space<vmem>>, vector<1x8x128xf32>
    %201 = vector.shape_cast %200 : vector<1x8x128xf32> to vector<8x128xf32>
    %cst_83 = arith.constant dense<0.000000e+00> : vector<8x128xf32>
    %202 = tpu.matmul %184, %4, %cst_83 {dimension_numbers = #tpu.dot_dimension_numbers<[1], [0], [0], [1], [0, 0, 1, 1], [], []>} : vector<8x128xf32>, vector<128x128xf32>, vector<8x128xf32> -> vector<8x128xf32>
    %203 = arith.addf %201, %202 : vector<8x128xf32>
    %204 = arith.negf %203 : vector<8x128xf32>
    %205 = math.exp %204 : vector<8x128xf32>
    %cst_84 = arith.constant 1.000000e+00 : f32
    %206 = vector.broadcast %cst_84 : f32 to vector<8x128xf32>
    %207 = arith.addf %206, %205 : vector<8x128xf32>
    %208 = arith.divf %206, %207 : vector<8x128xf32>
    %209 = arith.index_cast %c4_i32 : i32 to index
    %c0_85 = arith.constant 0 : index
    %c256_86 = arith.constant 256 : index
    %210 = vector.load %arg2[%209, %c0_85, %c256_86] : memref<8x8x512xf32, #tpu.memory_space<vmem>>, vector<1x8x128xf32>
    %211 = vector.shape_cast %210 : vector<1x8x128xf32> to vector<8x128xf32>
    %cst_87 = arith.constant dense<0.000000e+00> : vector<8x128xf32>
    %212 = tpu.matmul %184, %5, %cst_87 {dimension_numbers = #tpu.dot_dimension_numbers<[1], [0], [0], [1], [0, 0, 1, 1], [], []>} : vector<8x128xf32>, vector<128x128xf32>, vector<8x128xf32> -> vector<8x128xf32>
    %213 = arith.addf %211, %212 : vector<8x128xf32>
    %214 = math.tanh %213 : vector<8x128xf32>
    %215 = arith.mulf %208, %172 : vector<8x128xf32>
    %216 = arith.mulf %198, %214 : vector<8x128xf32>
    %217 = arith.addf %215, %216 : vector<8x128xf32>
    %218 = math.tanh %217 : vector<8x128xf32>
    %219 = arith.index_cast %c4_i32 : i32 to index
    %c0_88 = arith.constant 0 : index
    %c384_89 = arith.constant 384 : index
    %220 = vector.load %arg2[%219, %c0_88, %c384_89] : memref<8x8x512xf32, #tpu.memory_space<vmem>>, vector<1x8x128xf32>
    %221 = vector.shape_cast %220 : vector<1x8x128xf32> to vector<8x128xf32>
    %cst_90 = arith.constant dense<0.000000e+00> : vector<8x128xf32>
    %222 = tpu.matmul %184, %6, %cst_90 {dimension_numbers = #tpu.dot_dimension_numbers<[1], [0], [0], [1], [0, 0, 1, 1], [], []>} : vector<8x128xf32>, vector<128x128xf32>, vector<8x128xf32> -> vector<8x128xf32>
    %223 = arith.addf %221, %222 : vector<8x128xf32>
    %224 = arith.negf %223 : vector<8x128xf32>
    %225 = math.exp %224 : vector<8x128xf32>
    %cst_91 = arith.constant 1.000000e+00 : f32
    %226 = vector.broadcast %cst_91 : f32 to vector<8x128xf32>
    %227 = arith.addf %226, %225 : vector<8x128xf32>
    %228 = arith.divf %226, %227 : vector<8x128xf32>
    %229 = arith.mulf %228, %218 : vector<8x128xf32>
    %230 = arith.index_cast %c4_i32 : i32 to index
    %c0_92 = arith.constant 0 : index
    %c0_93 = arith.constant 0 : index
    %231 = vector.load %arg6[%230, %c0_92, %c0_93] : memref<8x8x128xf32, #tpu.memory_space<vmem>>, vector<1x8x128xf32>
    %232 = vector.shape_cast %231 : vector<1x8x128xf32> to vector<8x128xf32>
    %233 = vector.shape_cast %229 : vector<8x128xf32> to vector<1x8x128xf32>
    tpu.vector_store %arg6[%230, %c0_92, %c0_93], %233 {strides = array<i32>} : memref<8x8x128xf32, #tpu.memory_space<vmem>>, vector<1x8x128xf32>,
    %c5_i32 = arith.constant 5 : i32
    %234 = arith.index_cast %c5_i32 : i32 to index
    %c0_94 = arith.constant 0 : index
    %c0_95 = arith.constant 0 : index
    %235 = vector.load %arg2[%234, %c0_94, %c0_95] : memref<8x8x512xf32, #tpu.memory_space<vmem>>, vector<1x8x128xf32>
    %236 = vector.shape_cast %235 : vector<1x8x128xf32> to vector<8x128xf32>
    %cst_96 = arith.constant dense<0.000000e+00> : vector<8x128xf32>
    %237 = tpu.matmul %229, %3, %cst_96 {dimension_numbers = #tpu.dot_dimension_numbers<[1], [0], [0], [1], [0, 0, 1, 1], [], []>} : vector<8x128xf32>, vector<128x128xf32>, vector<8x128xf32> -> vector<8x128xf32>
    %238 = arith.addf %236, %237 : vector<8x128xf32>
    %239 = arith.negf %238 : vector<8x128xf32>
    %240 = math.exp %239 : vector<8x128xf32>
    %cst_97 = arith.constant 1.000000e+00 : f32
    %241 = vector.broadcast %cst_97 : f32 to vector<8x128xf32>
    %242 = arith.addf %241, %240 : vector<8x128xf32>
    %243 = arith.divf %241, %242 : vector<8x128xf32>
    %244 = arith.index_cast %c5_i32 : i32 to index
    %c0_98 = arith.constant 0 : index
    %c128_99 = arith.constant 128 : index
    %245 = vector.load %arg2[%244, %c0_98, %c128_99] : memref<8x8x512xf32, #tpu.memory_space<vmem>>, vector<1x8x128xf32>
    %246 = vector.shape_cast %245 : vector<1x8x128xf32> to vector<8x128xf32>
    %cst_100 = arith.constant dense<0.000000e+00> : vector<8x128xf32>
    %247 = tpu.matmul %229, %4, %cst_100 {dimension_numbers = #tpu.dot_dimension_numbers<[1], [0], [0], [1], [0, 0, 1, 1], [], []>} : vector<8x128xf32>, vector<128x128xf32>, vector<8x128xf32> -> vector<8x128xf32>
    %248 = arith.addf %246, %247 : vector<8x128xf32>
    %249 = arith.negf %248 : vector<8x128xf32>
    %250 = math.exp %249 : vector<8x128xf32>
    %cst_101 = arith.constant 1.000000e+00 : f32
    %251 = vector.broadcast %cst_101 : f32 to vector<8x128xf32>
    %252 = arith.addf %251, %250 : vector<8x128xf32>
    %253 = arith.divf %251, %252 : vector<8x128xf32>
    %254 = arith.index_cast %c5_i32 : i32 to index
    %c0_102 = arith.constant 0 : index
    %c256_103 = arith.constant 256 : index
    %255 = vector.load %arg2[%254, %c0_102, %c256_103] : memref<8x8x512xf32, #tpu.memory_space<vmem>>, vector<1x8x128xf32>
    %256 = vector.shape_cast %255 : vector<1x8x128xf32> to vector<8x128xf32>
    %cst_104 = arith.constant dense<0.000000e+00> : vector<8x128xf32>
    %257 = tpu.matmul %229, %5, %cst_104 {dimension_numbers = #tpu.dot_dimension_numbers<[1], [0], [0], [1], [0, 0, 1, 1], [], []>} : vector<8x128xf32>, vector<128x128xf32>, vector<8x128xf32> -> vector<8x128xf32>
    %258 = arith.addf %256, %257 : vector<8x128xf32>
    %259 = math.tanh %258 : vector<8x128xf32>
    %260 = arith.mulf %253, %217 : vector<8x128xf32>
    %261 = arith.mulf %243, %259 : vector<8x128xf32>
    %262 = arith.addf %260, %261 : vector<8x128xf32>
    %263 = math.tanh %262 : vector<8x128xf32>
    %264 = arith.index_cast %c5_i32 : i32 to index
    %c0_105 = arith.constant 0 : index
    %c384_106 = arith.constant 384 : index
    %265 = vector.load %arg2[%264, %c0_105, %c384_106] : memref<8x8x512xf32, #tpu.memory_space<vmem>>, vector<1x8x128xf32>
    %266 = vector.shape_cast %265 : vector<1x8x128xf32> to vector<8x128xf32>
    %cst_107 = arith.constant dense<0.000000e+00> : vector<8x128xf32>
    %267 = tpu.matmul %229, %6, %cst_107 {dimension_numbers = #tpu.dot_dimension_numbers<[1], [0], [0], [1], [0, 0, 1, 1], [], []>} : vector<8x128xf32>, vector<128x128xf32>, vector<8x128xf32> -> vector<8x128xf32>
    %268 = arith.addf %266, %267 : vector<8x128xf32>
    %269 = arith.negf %268 : vector<8x128xf32>
    %270 = math.exp %269 : vector<8x128xf32>
    %cst_108 = arith.constant 1.000000e+00 : f32
    %271 = vector.broadcast %cst_108 : f32 to vector<8x128xf32>
    %272 = arith.addf %271, %270 : vector<8x128xf32>
    %273 = arith.divf %271, %272 : vector<8x128xf32>
    %274 = arith.mulf %273, %263 : vector<8x128xf32>
    %275 = arith.index_cast %c5_i32 : i32 to index
    %c0_109 = arith.constant 0 : index
    %c0_110 = arith.constant 0 : index
    %276 = vector.load %arg6[%275, %c0_109, %c0_110] : memref<8x8x128xf32, #tpu.memory_space<vmem>>, vector<1x8x128xf32>
    %277 = vector.shape_cast %276 : vector<1x8x128xf32> to vector<8x128xf32>
    %278 = vector.shape_cast %274 : vector<8x128xf32> to vector<1x8x128xf32>
    tpu.vector_store %arg6[%275, %c0_109, %c0_110], %278 {strides = array<i32>} : memref<8x8x128xf32, #tpu.memory_space<vmem>>, vector<1x8x128xf32>,
    %c6_i32 = arith.constant 6 : i32
    %279 = arith.index_cast %c6_i32 : i32 to index
    %c0_111 = arith.constant 0 : index
    %c0_112 = arith.constant 0 : index
    %280 = vector.load %arg2[%279, %c0_111, %c0_112] : memref<8x8x512xf32, #tpu.memory_space<vmem>>, vector<1x8x128xf32>
    %281 = vector.shape_cast %280 : vector<1x8x128xf32> to vector<8x128xf32>
    %cst_113 = arith.constant dense<0.000000e+00> : vector<8x128xf32>
    %282 = tpu.matmul %274, %3, %cst_113 {dimension_numbers = #tpu.dot_dimension_numbers<[1], [0], [0], [1], [0, 0, 1, 1], [], []>} : vector<8x128xf32>, vector<128x128xf32>, vector<8x128xf32> -> vector<8x128xf32>
    %283 = arith.addf %281, %282 : vector<8x128xf32>
    %284 = arith.negf %283 : vector<8x128xf32>
    %285 = math.exp %284 : vector<8x128xf32>
    %cst_114 = arith.constant 1.000000e+00 : f32
    %286 = vector.broadcast %cst_114 : f32 to vector<8x128xf32>
    %287 = arith.addf %286, %285 : vector<8x128xf32>
    %288 = arith.divf %286, %287 : vector<8x128xf32>
    %289 = arith.index_cast %c6_i32 : i32 to index
    %c0_115 = arith.constant 0 : index
    %c128_116 = arith.constant 128 : index
    %290 = vector.load %arg2[%289, %c0_115, %c128_116] : memref<8x8x512xf32, #tpu.memory_space<vmem>>, vector<1x8x128xf32>
    %291 = vector.shape_cast %290 : vector<1x8x128xf32> to vector<8x128xf32>
    %cst_117 = arith.constant dense<0.000000e+00> : vector<8x128xf32>
    %292 = tpu.matmul %274, %4, %cst_117 {dimension_numbers = #tpu.dot_dimension_numbers<[1], [0], [0], [1], [0, 0, 1, 1], [], []>} : vector<8x128xf32>, vector<128x128xf32>, vector<8x128xf32> -> vector<8x128xf32>
    %293 = arith.addf %291, %292 : vector<8x128xf32>
    %294 = arith.negf %293 : vector<8x128xf32>
    %295 = math.exp %294 : vector<8x128xf32>
    %cst_118 = arith.constant 1.000000e+00 : f32
    %296 = vector.broadcast %cst_118 : f32 to vector<8x128xf32>
    %297 = arith.addf %296, %295 : vector<8x128xf32>
    %298 = arith.divf %296, %297 : vector<8x128xf32>
    %299 = arith.index_cast %c6_i32 : i32 to index
    %c0_119 = arith.constant 0 : index
    %c256_120 = arith.constant 256 : index
    %300 = vector.load %arg2[%299, %c0_119, %c256_120] : memref<8x8x512xf32, #tpu.memory_space<vmem>>, vector<1x8x128xf32>
    %301 = vector.shape_cast %300 : vector<1x8x128xf32> to vector<8x128xf32>
    %cst_121 = arith.constant dense<0.000000e+00> : vector<8x128xf32>
    %302 = tpu.matmul %274, %5, %cst_121 {dimension_numbers = #tpu.dot_dimension_numbers<[1], [0], [0], [1], [0, 0, 1, 1], [], []>} : vector<8x128xf32>, vector<128x128xf32>, vector<8x128xf32> -> vector<8x128xf32>
    %303 = arith.addf %301, %302 : vector<8x128xf32>
    %304 = math.tanh %303 : vector<8x128xf32>
    %305 = arith.mulf %298, %262 : vector<8x128xf32>
    %306 = arith.mulf %288, %304 : vector<8x128xf32>
    %307 = arith.addf %305, %306 : vector<8x128xf32>
    %308 = math.tanh %307 : vector<8x128xf32>
    %309 = arith.index_cast %c6_i32 : i32 to index
    %c0_122 = arith.constant 0 : index
    %c384_123 = arith.constant 384 : index
    %310 = vector.load %arg2[%309, %c0_122, %c384_123] : memref<8x8x512xf32, #tpu.memory_space<vmem>>, vector<1x8x128xf32>
    %311 = vector.shape_cast %310 : vector<1x8x128xf32> to vector<8x128xf32>
    %cst_124 = arith.constant dense<0.000000e+00> : vector<8x128xf32>
    %312 = tpu.matmul %274, %6, %cst_124 {dimension_numbers = #tpu.dot_dimension_numbers<[1], [0], [0], [1], [0, 0, 1, 1], [], []>} : vector<8x128xf32>, vector<128x128xf32>, vector<8x128xf32> -> vector<8x128xf32>
    %313 = arith.addf %311, %312 : vector<8x128xf32>
    %314 = arith.negf %313 : vector<8x128xf32>
    %315 = math.exp %314 : vector<8x128xf32>
    %cst_125 = arith.constant 1.000000e+00 : f32
    %316 = vector.broadcast %cst_125 : f32 to vector<8x128xf32>
    %317 = arith.addf %316, %315 : vector<8x128xf32>
    %318 = arith.divf %316, %317 : vector<8x128xf32>
    %319 = arith.mulf %318, %308 : vector<8x128xf32>
    %320 = arith.index_cast %c6_i32 : i32 to index
    %c0_126 = arith.constant 0 : index
    %c0_127 = arith.constant 0 : index
    %321 = vector.load %arg6[%320, %c0_126, %c0_127] : memref<8x8x128xf32, #tpu.memory_space<vmem>>, vector<1x8x128xf32>
    %322 = vector.shape_cast %321 : vector<1x8x128xf32> to vector<8x128xf32>
    %323 = vector.shape_cast %319 : vector<8x128xf32> to vector<1x8x128xf32>
    tpu.vector_store %arg6[%320, %c0_126, %c0_127], %323 {strides = array<i32>} : memref<8x8x128xf32, #tpu.memory_space<vmem>>, vector<1x8x128xf32>,
    %c7_i32 = arith.constant 7 : i32
    %324 = arith.index_cast %c7_i32 : i32 to index
    %c0_128 = arith.constant 0 : index
    %c0_129 = arith.constant 0 : index
    %325 = vector.load %arg2[%324, %c0_128, %c0_129] : memref<8x8x512xf32, #tpu.memory_space<vmem>>, vector<1x8x128xf32>
    %326 = vector.shape_cast %325 : vector<1x8x128xf32> to vector<8x128xf32>
    %cst_130 = arith.constant dense<0.000000e+00> : vector<8x128xf32>
    %327 = tpu.matmul %319, %3, %cst_130 {dimension_numbers = #tpu.dot_dimension_numbers<[1], [0], [0], [1], [0, 0, 1, 1], [], []>} : vector<8x128xf32>, vector<128x128xf32>, vector<8x128xf32> -> vector<8x128xf32>
    %328 = arith.addf %326, %327 : vector<8x128xf32>
    %329 = arith.negf %328 : vector<8x128xf32>
    %330 = math.exp %329 : vector<8x128xf32>
    %cst_131 = arith.constant 1.000000e+00 : f32
    %331 = vector.broadcast %cst_131 : f32 to vector<8x128xf32>
    %332 = arith.addf %331, %330 : vector<8x128xf32>
    %333 = arith.divf %331, %332 : vector<8x128xf32>
    %334 = arith.index_cast %c7_i32 : i32 to index
    %c0_132 = arith.constant 0 : index
    %c128_133 = arith.constant 128 : index
    %335 = vector.load %arg2[%334, %c0_132, %c128_133] : memref<8x8x512xf32, #tpu.memory_space<vmem>>, vector<1x8x128xf32>
    %336 = vector.shape_cast %335 : vector<1x8x128xf32> to vector<8x128xf32>
    %cst_134 = arith.constant dense<0.000000e+00> : vector<8x128xf32>
    %337 = tpu.matmul %319, %4, %cst_134 {dimension_numbers = #tpu.dot_dimension_numbers<[1], [0], [0], [1], [0, 0, 1, 1], [], []>} : vector<8x128xf32>, vector<128x128xf32>, vector<8x128xf32> -> vector<8x128xf32>
    %338 = arith.addf %336, %337 : vector<8x128xf32>
    %339 = arith.negf %338 : vector<8x128xf32>
    %340 = math.exp %339 : vector<8x128xf32>
    %cst_135 = arith.constant 1.000000e+00 : f32
    %341 = vector.broadcast %cst_135 : f32 to vector<8x128xf32>
    %342 = arith.addf %341, %340 : vector<8x128xf32>
    %343 = arith.divf %341, %342 : vector<8x128xf32>
    %344 = arith.index_cast %c7_i32 : i32 to index
    %c0_136 = arith.constant 0 : index
    %c256_137 = arith.constant 256 : index
    %345 = vector.load %arg2[%344, %c0_136, %c256_137] : memref<8x8x512xf32, #tpu.memory_space<vmem>>, vector<1x8x128xf32>
    %346 = vector.shape_cast %345 : vector<1x8x128xf32> to vector<8x128xf32>
    %cst_138 = arith.constant dense<0.000000e+00> : vector<8x128xf32>
    %347 = tpu.matmul %319, %5, %cst_138 {dimension_numbers = #tpu.dot_dimension_numbers<[1], [0], [0], [1], [0, 0, 1, 1], [], []>} : vector<8x128xf32>, vector<128x128xf32>, vector<8x128xf32> -> vector<8x128xf32>
    %348 = arith.addf %346, %347 : vector<8x128xf32>
    %349 = math.tanh %348 : vector<8x128xf32>
    %350 = arith.mulf %343, %307 : vector<8x128xf32>
    %351 = arith.mulf %333, %349 : vector<8x128xf32>
    %352 = arith.addf %350, %351 : vector<8x128xf32>
    %353 = math.tanh %352 : vector<8x128xf32>
    %354 = arith.index_cast %c7_i32 : i32 to index
    %c0_139 = arith.constant 0 : index
    %c384_140 = arith.constant 384 : index
    %355 = vector.load %arg2[%354, %c0_139, %c384_140] : memref<8x8x512xf32, #tpu.memory_space<vmem>>, vector<1x8x128xf32>
    %356 = vector.shape_cast %355 : vector<1x8x128xf32> to vector<8x128xf32>
    %cst_141 = arith.constant dense<0.000000e+00> : vector<8x128xf32>
    %357 = tpu.matmul %319, %6, %cst_141 {dimension_numbers = #tpu.dot_dimension_numbers<[1], [0], [0], [1], [0, 0, 1, 1], [], []>} : vector<8x128xf32>, vector<128x128xf32>, vector<8x128xf32> -> vector<8x128xf32>
    %358 = arith.addf %356, %357 : vector<8x128xf32>
    %359 = arith.negf %358 : vector<8x128xf32>
    %360 = math.exp %359 : vector<8x128xf32>
    %cst_142 = arith.constant 1.000000e+00 : f32
    %361 = vector.broadcast %cst_142 : f32 to vector<8x128xf32>
    %362 = arith.addf %361, %360 : vector<8x128xf32>
    %363 = arith.divf %361, %362 : vector<8x128xf32>
    %364 = arith.mulf %363, %353 : vector<8x128xf32>
    %365 = arith.index_cast %c7_i32 : i32 to index
    %c0_143 = arith.constant 0 : index
    %c0_144 = arith.constant 0 : index
    %366 = vector.load %arg6[%365, %c0_143, %c0_144] : memref<8x8x128xf32, #tpu.memory_space<vmem>>, vector<1x8x128xf32>
    %367 = vector.shape_cast %366 : vector<1x8x128xf32> to vector<8x128xf32>
    %368 = vector.shape_cast %364 : vector<8x128xf32> to vector<1x8x128xf32>
    tpu.vector_store %arg6[%365, %c0_143, %c0_144], %368 {strides = array<i32>} : memref<8x8x128xf32, #tpu.memory_space<vmem>>, vector<1x8x128xf32>,
    %c8_i32 = arith.constant 8 : i32
    %c0_145 = arith.constant 0 : index
    %c0_146 = arith.constant 0 : index
    %369 = vector.load %arg7[%c0_145, %c0_146] : memref<8x128xf32, #tpu.memory_space<vmem>>, vector<8x128xf32>
    tpu.vector_store %arg7[%c0_145, %c0_146], %364 {strides = array<i32>} : memref<8x128xf32, #tpu.memory_space<vmem>>, vector<8x128xf32>,
    %c0_147 = arith.constant 0 : index
    %c0_148 = arith.constant 0 : index
    %370 = vector.load %arg8[%c0_147, %c0_148] : memref<8x128xf32, #tpu.memory_space<vmem>>, vector<8x128xf32>
    tpu.vector_store %arg8[%c0_147, %c0_148], %352 {strides = array<i32>} : memref<8x128xf32, #tpu.memory_space<vmem>>, vector<8x128xf32>,
    return
  }
  func.func @transform_0(%arg0: i32, %arg1: i32) -> (i32, i32, i32) {
    %c0_i32 = arith.constant 0 : i32
    %c0_i32_0 = arith.constant 0 : i32
    return %arg1, %arg0, %c0_i32 : i32, i32, i32
  }
  func.func @transform_1(%arg0: i32, %arg1: i32) -> (i32, i32) {
    %c0_i32 = arith.constant 0 : i32
    %c0_i32_0 = arith.constant 0 : i32
    %c0_i32_1 = arith.constant 0 : i32
    return %c0_i32, %c0_i32_0 : i32, i32
  }
  func.func @transform_2(%arg0: i32, %arg1: i32) -> (i32, i32) {
    %c0_i32 = arith.constant 0 : i32
    %c0_i32_0 = arith.constant 0 : i32
    return %arg0, %c0_i32 : i32, i32
  }
  func.func @transform_3(%arg0: i32, %arg1: i32) -> (i32, i32) {
    %c0_i32 = arith.constant 0 : i32
    %c0_i32_0 = arith.constant 0 : i32
    return %arg0, %c0_i32 : i32, i32
  }
  func.func @transform_4(%arg0: i32, %arg1: i32) -> (i32, i32, i32) {
    %c0_i32 = arith.constant 0 : i32
    %c0_i32_0 = arith.constant 0 : i32
    return %arg1, %arg0, %c0_i32 : i32, i32, i32
  }
  func.func @transform_5(%arg0: i32, %arg1: i32) -> (i32, i32) {
    %c0_i32 = arith.constant 0 : i32
    %c0_i32_0 = arith.constant 0 : i32
    return %arg0, %c0_i32 : i32, i32
  }
  func.func @transform_6(%arg0: i32, %arg1: i32) -> (i32, i32) {
    %c0_i32 = arith.constant 0 : i32
    %c0_i32_0 = arith.constant 0 : i32
    return %arg0, %c0_i32 : i32, i32
  }
}

</mosaic_0001>

<llo_original>
// kernel: tpu_custom_call.1
$region0: #{tpu_custom_call.1}
  #allocation0 [shape = 'u32[]', space=smem, size = 0x4, offset = 0x4, fixed_abs, tag = 'smem constant byte address 0x4 - core index']
  #allocation1 [shape = 'u32[72,128]{1,0:T(1,128)}', space=vmem, size = 0x9000, scoped, tag = 'internal scratch']
  %s0 = inlined_call_operand.hbm [shape: f32[8,8,512], index: 0, kind: input, shape index: {}]
  %s1 = inlined_call_operand.hbm [shape: f32[128,512], index: 1, kind: input, shape index: {}]
  %s2 = inlined_call_operand.hbm [shape: f32[8,128], index: 2, kind: input, shape index: {}]
  %s3 = inlined_call_operand.hbm [shape: f32[8,128], index: 3, kind: input, shape index: {}]
  %s4 = inlined_call_operand.hbm [shape: f32[8,8,128], index: 4, kind: output, shape index: {0}]
  %s5 = inlined_call_operand.hbm [shape: f32[8,128], index: 5, kind: output, shape index: {1}]
  %s6 = inlined_call_operand.hbm [shape: f32[8,128], index: 6, kind: output, shape index: {2}]
  %7 = xla_tuple %s4, %s5, %s6
  %s8 = sld [smem:[#allocation0]]
  $region62: #{tpu_custom_call.1} parent=0
    _
  %s10 = ssub.s32 1, %s8
  %s11 = scalar_select 0, %s10, %s8
  $region1: #{tpu_custom_call.1} parent=0
    #allocation2 [shape = 'u8[131072]{0}', space=vmem, size = 0x20000, scoped, tag = 'input window, operand 0, single buffered']
    #allocation3 [shape = 's32[1]{0}', space=sflag, size = 0x4, scoped, tag = 'scoped memory for tpu_custom_call.1']
    #allocation4 [shape = 's32[1]{0}', space=sflag, size = 0x4, scoped, tag = 'scoped memory for tpu_custom_call.1']
    #allocation5 [shape = 'u8[262144]{0}', space=vmem, size = 0x40000, scoped, tag = 'input window, operand 1, single buffered']
    #allocation6 [shape = 's32[1]{0}', space=sflag, size = 0x4, scoped, tag = 'scoped memory for tpu_custom_call.1']
    #allocation7 [shape = 'u8[4096]{0}', space=vmem, size = 0x1000, scoped, tag = 'input window, operand 2, single buffered']
    #allocation8 [shape = 'u8[4096]{0}', space=vmem, size = 0x1000, scoped, tag = 'input window, operand 3, single buffered']
    #allocation9 [shape = 's32[1]{0}', space=sflag, size = 0x4, scoped, tag = 'scoped memory for tpu_custom_call.1']
    #allocation10 [shape = 'u8[32768]{0}', space=vmem, size = 0x8000, scoped, tag = 'output window, operand 0, single buffered']
    #allocation11 [shape = 'u8[4096]{0}', space=vmem, size = 0x1000, scoped, tag = 'output window, operand 1, single buffered']
    #allocation12 [shape = 's32[1]{0}', space=sflag, size = 0x4, scoped, tag = 'scoped memory for tpu_custom_call.1']
    #allocation13 [shape = 'u8[4096]{0}', space=vmem, size = 0x1000, scoped, tag = 'output window, operand 2, single buffered']
    %12 = vsyncpa [#allocation3], 0
    %13 = vsyncpa [#allocation6], 0
    %14 = vsyncpa [#allocation9], 0
    %15 = vsyncpa [#allocation4], 0
    %16 = vsyncpa [#allocation12], 0
    // Predicated region
    $region2: #{tpu_custom_call.1} parent=1 // pred_check
      _
    $region3: #{tpu_custom_call.1} parent=1 // pred_check_branch
      %18 = sbr.rel (0) target = $region5
    $region4: #{tpu_custom_call.1} parent=1 // pred_region
      %20 = vsyncadd [#allocation3], 0
      %s21 = sshll.u32 %s0, 4
      %s22 = int_to_ptr.hbm [resolvable:$true] %s21
      %s23 = sshll.u32 [#allocation2], 4
      %s24 = int_to_ptr.vmem [resolvable:$true] %s23
      %29 = dma.hbm_to_vmem [thread:$0]  %s22, 4096, %s24, [#allocation3], 512, 512, 32
    $region5: #{tpu_custom_call.1} parent=1 // pred_fallthru
      _
    // Predicated region
    $region6: #{tpu_custom_call.1} parent=1 // pred_check
      _
    $region7: #{tpu_custom_call.1} parent=1 // pred_check_branch
      %31 = sbr.rel (0) target = $region9
    $region8: #{tpu_custom_call.1} parent=1 // pred_region
      %33 = vsyncadd [#allocation6], 0
      %s34 = sshll.u32 %s1, 4
      %s35 = int_to_ptr.hbm [resolvable:$true] %s34
      %s36 = sshll.u32 [#allocation5], 4
      %s37 = int_to_ptr.vmem [resolvable:$true] %s36
      %42 = dma.hbm_to_vmem [thread:$0]  %s35, 8192, %s37, [#allocation6], 512, 512, 32
    $region9: #{tpu_custom_call.1} parent=1 // pred_fallthru
      _
    // Predicated region
    $region10: #{tpu_custom_call.1} parent=1 // pred_check
      _
    $region11: #{tpu_custom_call.1} parent=1 // pred_check_branch
      %44 = sbr.rel (0) target = $region13
    $region12: #{tpu_custom_call.1} parent=1 // pred_region
      %46 = vsyncadd [#allocation6], 0
      %s48 = sshll.u32 %s2, 4
      %s49 = int_to_ptr.hbm [resolvable:$true] %s48
      %s50 = sshll.u32 [#allocation7], 4
      %s51 = int_to_ptr.vmem [resolvable:$true] %s50
      %53 = dma.hbm_to_vmem [thread:$0]  %s49, 128, %s51, [#allocation6]
    $region13: #{tpu_custom_call.1} parent=1 // pred_fallthru
      _
    // Predicated region
    $region14: #{tpu_custom_call.1} parent=1 // pred_check
      _
    $region15: #{tpu_custom_call.1} parent=1 // pred_check_branch
      %55 = sbr.rel (0) target = $region17
    $region16: #{tpu_custom_call.1} parent=1 // pred_region
      %57 = vsyncadd [#allocation9], 0
      %s59 = sshll.u32 %s3, 4
      %s60 = int_to_ptr.hbm [resolvable:$true] %s59
      %s61 = sshll.u32 [#allocation8], 4
      %s62 = int_to_ptr.vmem [resolvable:$true] %s61
      %64 = dma.hbm_to_vmem [thread:$0]  %s60, 128, %s62, [#allocation9]
    $region17: #{tpu_custom_call.1} parent=1 // pred_fallthru
      _
    // Predicated region
    $region18: #{tpu_custom_call.1} parent=1 // pred_check
      _
    $region19: #{tpu_custom_call.1} parent=1 // pred_check_branch
      %66 = sbr.rel (0) target = $region21
    $region20: #{tpu_custom_call.1} parent=1 // pred_region
      %68 = dma.done [#allocation3], 4096
    $region21: #{tpu_custom_call.1} parent=1 // pred_fallthru
      _
    // Predicated region
    $region22: #{tpu_custom_call.1} parent=1 // pred_check
      _
    $region23: #{tpu_custom_call.1} parent=1 // pred_check_branch
      %70 = sbr.rel (0) target = $region25
    $region24: #{tpu_custom_call.1} parent=1 // pred_region
      %72 = dma.done [#allocation6], 8192
    $region25: #{tpu_custom_call.1} parent=1 // pred_fallthru
      _
    // Predicated region
    $region26: #{tpu_custom_call.1} parent=1 // pred_check
      _
    $region27: #{tpu_custom_call.1} parent=1 // pred_check_branch
      %74 = sbr.rel (0) target = $region29
    $region28: #{tpu_custom_call.1} parent=1 // pred_region
      %76 = dma.done [#allocation6], 128
    $region29: #{tpu_custom_call.1} parent=1 // pred_fallthru
      _
    // Predicated region
    $region30: #{tpu_custom_call.1} parent=1 // pred_check
      _
    $region31: #{tpu_custom_call.1} parent=1 // pred_check_branch
      %78 = sbr.rel (0) target = $region33
    $region32: #{tpu_custom_call.1} parent=1 // pred_region
      %80 = dma.done [#allocation9], 128
    $region33: #{tpu_custom_call.1} parent=1 // pred_fallthru
      _
    %p81 = scmp.eq.s32.totalorder 0, 0
    // Predicated region
    $region34: #{tpu_custom_call.1} parent=1 // pred_check
      %p82 = pneg %p81
    $region35: #{tpu_custom_call.1} parent=1 // pred_check_branch
      %84 = sbr.rel (%p82) target = $region37
    $region36: #{tpu_custom_call.1} parent=1 // pred_region
      %v85 = vld [vmem:[#allocation7] sm:$0xff]
      %86 = vst [vmem:[#allocation11] sm:$0xff] %v85
      %v87 = vld [vmem:[#allocation8] sm:$0xff]
      %88 = vst [vmem:[#allocation13] sm:$0xff] %v87
    $region37: #{tpu_custom_call.1} parent=1 // pred_fallthru
      _
    %v89 = vld [vmem:[#allocation5] sm:$0xff]
    %v90 = vld [vmem:[#allocation5 + $0x20] sm:$0xff]
    %v91 = vld [vmem:[#allocation5 + $0x40] sm:$0xff]
    %v92 = vld [vmem:[#allocation5 + $0x60] sm:$0xff]
    %v93 = vld [vmem:[#allocation5 + $0x80] sm:$0xff]
    %v94 = vld [vmem:[#allocation5 + $0xa0] sm:$0xff]
    %v95 = vld [vmem:[#allocation5 + $0xc0] sm:$0xff]
    %v96 = vld [vmem:[#allocation5 + $0xe0] sm:$0xff]
    %v97 = vld [vmem:[#allocation5 + $0x100] sm:$0xff]
    %v98 = vld [vmem:[#allocation5 + $0x120] sm:$0xff]
    %v99 = vld [vmem:[#allocation5 + $0x140] sm:$0xff]
    %v100 = vld [vmem:[#allocation5 + $0x160] sm:$0xff]
    %v101 = vld [vmem:[#allocation5 + $0x180] sm:$0xff]
    %v102 = vld [vmem:[#allocation5 + $0x1a0] sm:$0xff]
    %v103 = vld [vmem:[#allocation5 + $0x1c0] sm:$0xff]
    %v104 = vld [vmem:[#allocation5 + $0x1e0] sm:$0xff]
    %v105 = vld [vmem:[#allocation5 + $0x8] sm:$0xff]
    %v106 = vld [vmem:[#allocation5 + $0x28] sm:$0xff]
    %v107 = vld [vmem:[#allocation5 + $0x48] sm:$0xff]
    %v108 = vld [vmem:[#allocation5 + $0x68] sm:$0xff]
    %v109 = vld [vmem:[#allocation5 + $0x88] sm:$0xff]
    %v110 = vld [vmem:[#allocation5 + $0xa8] sm:$0xff]
    %v111 = vld [vmem:[#allocation5 + $0xc8] sm:$0xff]
    %v112 = vld [vmem:[#allocation5 + $0xe8] sm:$0xff]
    %v113 = vld [vmem:[#allocation5 + $0x108] sm:$0xff]
    %v114 = vld [vmem:[#allocation5 + $0x128] sm:$0xff]
    %v115 = vld [vmem:[#allocation5 + $0x148] sm:$0xff]
    %v116 = vld [vmem:[#allocation5 + $0x168] sm:$0xff]
    %v117 = vld [vmem:[#allocation5 + $0x188] sm:$0xff]
    %v118 = vld [vmem:[#allocation5 + $0x1a8] sm:$0xff]
    %v119 = vld [vmem:[#allocation5 + $0x1c8] sm:$0xff]
    %v120 = vld [vmem:[#allocation5 + $0x1e8] sm:$0xff]
    %v121 = vld [vmem:[#allocation5 + $0x10] sm:$0xff]
    %v122 = vld [vmem:[#allocation5 + $0x30] sm:$0xff]
    %v123 = vld [vmem:[#allocation5 + $0x50] sm:$0xff]
    %v124 = vld [vmem:[#allocation5 + $0x70] sm:$0xff]
    %v125 = vld [vmem:[#allocation5 + $0x90] sm:$0xff]
    %v126 = vld [vmem:[#allocation5 + $0xb0] sm:$0xff]
    %v127 = vld [vmem:[#allocation5 + $0xd0] sm:$0xff]
    %v128 = vld [vmem:[#allocation5 + $0xf0] sm:$0xff]
    %v129 = vld [vmem:[#allocation5 + $0x110] sm:$0xff]
    %v130 = vld [vmem:[#allocation5 + $0x130] sm:$0xff]
    %v131 = vld [vmem:[#allocation5 + $0x150] sm:$0xff]
    %v132 = vld [vmem:[#allocation5 + $0x170] sm:$0xff]
    %v133 = vld [vmem:[#allocation5 + $0x190] sm:$0xff]
    %v134 = vld [vmem:[#allocation5 + $0x1b0] sm:$0xff]
    %v135 = vld [vmem:[#allocation5 + $0x1d0] sm:$0xff]
    %v136 = vld [vmem:[#allocation5 + $0x1f0] sm:$0xff]
    %v137 = vld [vmem:[#allocation5 + $0x18] sm:$0xff]
    %v138 = vld [vmem:[#allocation5 + $0x38] sm:$0xff]
    %v139 = vld [vmem:[#allocation5 + $0x58] sm:$0xff]
    %v140 = vld [vmem:[#allocation5 + $0x78] sm:$0xff]
    %v141 = vld [vmem:[#allocation5 + $0x98] sm:$0xff]
    %v142 = vld [vmem:[#allocation5 + $0xb8] sm:$0xff]
    %v143 = vld [vmem:[#allocation5 + $0xd8] sm:$0xff]
    %v144 = vld [vmem:[#allocation5 + $0xf8] sm:$0xff]
    %v145 = vld [vmem:[#allocation5 + $0x118] sm:$0xff]
    %v146 = vld [vmem:[#allocation5 + $0x138] sm:$0xff]
    %v147 = vld [vmem:[#allocation5 + $0x158] sm:$0xff]
    %v148 = vld [vmem:[#allocation5 + $0x178] sm:$0xff]
    %v149 = vld [vmem:[#allocation5 + $0x198] sm:$0xff]
    %v150 = vld [vmem:[#allocation5 + $0x1b8] sm:$0xff]
    %v151 = vld [vmem:[#allocation5 + $0x1d8] sm:$0xff]
    %v152 = vld [vmem:[#allocation5 + $0x1f8] sm:$0xff]
    %v153 = vld [vmem:[#allocation11] sm:$0xff]
    %v154 = vld [vmem:[#allocation13] sm:$0xff]
    %v155 = vld [vmem:[#allocation2] sm:$0xff]
    %156 = vmatpush.msra.mxu0 %v104
    %157 = vmatpush.msra.mxu0 %v103
    %158 = vmatpush.msra.mxu0 %v102
    %159 = vmatpush.msra.mxu0 %v101
    %160 = vmatpush.msra.mxu0 %v100
    %161 = vmatpush.msra.mxu0 %v99
    %162 = vmatpush.msra.mxu0 %v98
    %163 = vmatpush.msra.mxu0 %v97
    %164 = vmatpush.msra.mxu0 %v96
    %165 = vmatpush.msra.mxu0 %v95
    %166 = vmatpush.msra.mxu0 %v94
    %167 = vmatpush.msra.mxu0 %v93
    %168 = vmatpush.msra.mxu0 %v92
    %169 = vmatpush.msra.mxu0 %v91
    %170 = vmatpush.msra.mxu0 %v90
    %171 = vmatpush.msra.mxu0 %v89
    %172 = vmatmul.f32.gmra.mxu0 %v153
    %v173 = vpop.f32.mrf.mxu0
    %v174 = vadd.f32 0.0, %v173
    %175 = vdwg.mxu0
    %v176 = vadd.f32 %v155, %v174
    %v177 = vxor.u32 %v176, 2147483648
    %v178 = vmul.f32 %v177, 1.442695
    %v179 = vpow.pop %v178
    %v180 = vadd.f32 %v179, 1.0
    %v181 = vrcp.pop %v180
    %v182 = vmul.f32 %v180, %v181
    %v183 = vsub.f32 1.0, %v182
    %v184 = vmul.f32 %v181, %v183
    %v185 = vadd.f32 %v181, %v184
    %vm186 = vweird.f32 %v180
    %vm187 = vweird.f32 %v181
    %vm188 = vmor %vm186, %vm187
    %v189 = vsel %vm188, %v181, %v185
    %v190 = vand.u32 2147483647, %v180
    %vm191 = vcmp.eq.f32.partialorder %v190, 8.507059e+37
    %v192 = vand.u32 %v180, 2147483648
    %v193 = vor.u32 1.1754944e-38, %v192
    %v194 = vsel %vm191, %v193, %v189
    %v195 = vmul.f32 1.0, %v194
    %v196 = vld [vmem:[#allocation2 + $0x8] sm:$0xff]
    %197 = vmatpush.msra.mxu0 %v120
    %198 = vmatpush.msra.mxu0 %v119
    %199 = vmatpush.msra.mxu0 %v118
    %200 = vmatpush.msra.mxu0 %v117
    %201 = vmatpush.msra.mxu0 %v116
    %202 = vmatpush.msra.mxu0 %v115
    %203 = vmatpush.msra.mxu0 %v114
    %204 = vmatpush.msra.mxu0 %v113
    %205 = vmatpush.msra.mxu0 %v112
    %206 = vmatpush.msra.mxu0 %v111
    %207 = vmatpush.msra.mxu0 %v110
    %208 = vmatpush.msra.mxu0 %v109
    %209 = vmatpush.msra.mxu0 %v108
    %210 = vmatpush.msra.mxu0 %v107
    %211 = vmatpush.msra.mxu0 %v106
    %212 = vmatpush.msra.mxu0 %v105
    %213 = vmatmul.f32.gmra.mxu0 %v153
    %v214 = vpop.f32.mrf.mxu0
    %v215 = vadd.f32 0.0, %v214
    %216 = vdwg.mxu0
    %v217 = vadd.f32 %v196, %v215
    %v218 = vxor.u32 %v217, 2147483648
    %v219 = vmul.f32 %v218, 1.442695
    %v220 = vpow.pop %v219
    %v221 = vadd.f32 %v220, 1.0
    %v222 = vrcp.pop %v221
    %v223 = vmul.f32 %v221, %v222
    %v224 = vsub.f32 1.0, %v223
    %v225 = vmul.f32 %v222, %v224
    %v226 = vadd.f32 %v222, %v225
    %vm227 = vweird.f32 %v221
    %vm228 = vweird.f32 %v222
    %vm229 = vmor %vm227, %vm228
    %v230 = vsel %vm229, %v222, %v226
    %v231 = vand.u32 2147483647, %v221
    %vm232 = vcmp.eq.f32.partialorder %v231, 8.507059e+37
    %v233 = vand.u32 %v221, 2147483648
    %v234 = vor.u32 1.1754944e-38, %v233
    %v235 = vsel %vm232, %v234, %v230
    %v236 = vmul.f32 1.0, %v235
    %v237 = vld [vmem:[#allocation2 + $0x10] sm:$0xff]
    %238 = vmatpush.msra.mxu0 %v136
    %239 = vmatpush.msra.mxu0 %v135
    %240 = vmatpush.msra.mxu0 %v134
    %241 = vmatpush.msra.mxu0 %v133
    %242 = vmatpush.msra.mxu0 %v132
    %243 = vmatpush.msra.mxu0 %v131
    %244 = vmatpush.msra.mxu0 %v130
    %245 = vmatpush.msra.mxu0 %v129
    %246 = vmatpush.msra.mxu0 %v128
    %247 = vmatpush.msra.mxu0 %v127
    %248 = vmatpush.msra.mxu0 %v126
    %249 = vmatpush.msra.mxu0 %v125
    %250 = vmatpush.msra.mxu0 %v124
    %251 = vmatpush.msra.mxu0 %v123
    %252 = vmatpush.msra.mxu0 %v122
    %253 = vmatpush.msra.mxu0 %v121
    %254 = vmatmul.f32.gmra.mxu0 %v153
    %v255 = vpop.f32.mrf.mxu0
    %v256 = vadd.f32 0.0, %v255
    %257 = vdwg.mxu0
    %v258 = vadd.f32 %v237, %v256
    %v259 = vtanh.pop %v258
    %v260 = vmul.f32 %v236, %v154
    %v261 = vmul.f32 %v195, %v259
    %v262 = vadd.f32 %v260, %v261
    %v263 = vtanh.pop %v262
    %v264 = vld [vmem:[#allocation2 + $0x18] sm:$0xff]
    %265 = vmatpush.msra.mxu0 %v152
    %266 = vmatpush.msra.mxu0 %v151
    %267 = vmatpush.msra.mxu0 %v150
    %268 = vmatpush.msra.mxu0 %v149
    %269 = vmatpush.msra.mxu0 %v148
    %270 = vmatpush.msra.mxu0 %v147
    %271 = vmatpush.msra.mxu0 %v146
    %272 = vmatpush.msra.mxu0 %v145
    %273 = vmatpush.msra.mxu0 %v144
    %274 = vmatpush.msra.mxu0 %v143
    %275 = vmatpush.msra.mxu0 %v142
    %276 = vmatpush.msra.mxu0 %v141
    %277 = vmatpush.msra.mxu0 %v140
    %278 = vmatpush.msra.mxu0 %v139
    %279 = vmatpush.msra.mxu0 %v138
    %280 = vmatpush.msra.mxu0 %v137
    %281 = vmatmul.f32.gmra.mxu0 %v153
    %v282 = vpop.f32.mrf.mxu0
    %v283 = vadd.f32 0.0, %v282
    %284 = vdwg.mxu0
    %v285 = vadd.f32 %v264, %v283
    %v286 = vxor.u32 %v285, 2147483648
    %v287 = vmul.f32 %v286, 1.442695
    %v288 = vpow.pop %v287
    %v289 = vadd.f32 %v288, 1.0
    %v290 = vrcp.pop %v289
    %v291 = vmul.f32 %v289, %v290
    %v292 = vsub.f32 1.0, %v291
    %v293 = vmul.f32 %v290, %v292
    %v294 = vadd.f32 %v290, %v293
    %vm295 = vweird.f32 %v289
    %vm296 = vweird.f32 %v290
    %vm297 = vmor %vm295, %vm296
    %v298 = vsel %vm297, %v290, %v294
    %v299 = vand.u32 2147483647, %v289
    %vm300 = vcmp.eq.f32.partialorder %v299, 8.507059e+37
    %v301 = vand.u32 %v289, 2147483648
    %v302 = vor.u32 1.1754944e-38, %v301
    %v303 = vsel %vm300, %v302, %v298
    %v304 = vmul.f32 1.0, %v303
    %v305 = vmul.f32 %v304, %v263
    %306 = vst [vmem:[#allocation10] sm:$0xff] %v305
    %s307 = scalar_lea.vmem [#allocation2], 32
    %v308 = vld [vmem:[%s307] sm:$0xff]
    %309 = vmatpush.msra.mxu0 %v104
    %310 = vmatpush.msra.mxu0 %v103
    %311 = vmatpush.msra.mxu0 %v102
    %312 = vmatpush.msra.mxu0 %v101
    %313 = vmatpush.msra.mxu0 %v100
    %314 = vmatpush.msra.mxu0 %v99
    %315 = vmatpush.msra.mxu0 %v98
    %316 = vmatpush.msra.mxu0 %v97
    %317 = vmatpush.msra.mxu0 %v96
    %318 = vmatpush.msra.mxu0 %v95
    %319 = vmatpush.msra.mxu0 %v94
    %320 = vmatpush.msra.mxu0 %v93
    %321 = vmatpush.msra.mxu0 %v92
    %322 = vmatpush.msra.mxu0 %v91
    %323 = vmatpush.msra.mxu0 %v90
    %324 = vmatpush.msra.mxu0 %v89
    %325 = vmatmul.f32.gmra.mxu0 %v305
    %v326 = vpop.f32.mrf.mxu0
    %v327 = vadd.f32 0.0, %v326
    %328 = vdwg.mxu0
    %v329 = vadd.f32 %v308, %v327
    %v330 = vxor.u32 %v329, 2147483648
    %v331 = vmul.f32 %v330, 1.442695
    %v332 = vpow.pop %v331
    %v333 = vadd.f32 %v332, 1.0
    %v334 = vrcp.pop %v333
    %v335 = vmul.f32 %v333, %v334
    %v336 = vsub.f32 1.0, %v335
    %v337 = vmul.f32 %v334, %v336
    %v338 = vadd.f32 %v334, %v337
    %vm339 = vweird.f32 %v333
    %vm340 = vweird.f32 %v334
    %vm341 = vmor %vm339, %vm340
    %v342 = vsel %vm341, %v334, %v338
    %v343 = vand.u32 2147483647, %v333
    %vm344 = vcmp.eq.f32.partialorder %v343, 8.507059e+37
    %v345 = vand.u32 %v333, 2147483648
    %v346 = vor.u32 1.1754944e-38, %v345
    %v347 = vsel %vm344, %v346, %v342
    %v348 = vmul.f32 1.0, %v347
    %v349 = vld [vmem:[%s307 + $0x8] sm:$0xff]
    %350 = vmatpush.msra.mxu0 %v120
    %351 = vmatpush.msra.mxu0 %v119
    %352 = vmatpush.msra.mxu0 %v118
    %353 = vmatpush.msra.mxu0 %v117
    %354 = vmatpush.msra.mxu0 %v116
    %355 = vmatpush.msra.mxu0 %v115
    %356 = vmatpush.msra.mxu0 %v114
    %357 = vmatpush.msra.mxu0 %v113
    %358 = vmatpush.msra.mxu0 %v112
    %359 = vmatpush.msra.mxu0 %v111
    %360 = vmatpush.msra.mxu0 %v110
    %361 = vmatpush.msra.mxu0 %v109
    %362 = vmatpush.msra.mxu0 %v108
    %363 = vmatpush.msra.mxu0 %v107
    %364 = vmatpush.msra.mxu0 %v106
    %365 = vmatpush.msra.mxu0 %v105
    %366 = vmatmul.f32.gmra.mxu0 %v305
    %v367 = vpop.f32.mrf.mxu0
    %v368 = vadd.f32 0.0, %v367
    %369 = vdwg.mxu0
    %v370 = vadd.f32 %v349, %v368
    %v371 = vxor.u32 %v370, 2147483648
    %v372 = vmul.f32 %v371, 1.442695
    %v373 = vpow.pop %v372
    %v374 = vadd.f32 %v373, 1.0
    %v375 = vrcp.pop %v374
    %v376 = vmul.f32 %v374, %v375
    %v377 = vsub.f32 1.0, %v376
    %v378 = vmul.f32 %v375, %v377
    %v379 = vadd.f32 %v375, %v378
    %vm380 = vweird.f32 %v374
    %vm381 = vweird.f32 %v375
    %vm382 = vmor %vm380, %vm381
    %v383 = vsel %vm382, %v375, %v379
    %v384 = vand.u32 2147483647, %v374
    %vm385 = vcmp.eq.f32.partialorder %v384, 8.507059e+37
    %v386 = vand.u32 %v374, 2147483648
    %v387 = vor.u32 1.1754944e-38, %v386
    %v388 = vsel %vm385, %v387, %v383
    %v389 = vmul.f32 1.0, %v388
    %v390 = vld [vmem:[%s307 + $0x10] sm:$0xff]
    %391 = vmatpush.msra.mxu0 %v136
    %392 = vmatpush.msra.mxu0 %v135
    %393 = vmatpush.msra.mxu0 %v134
    %394 = vmatpush.msra.mxu0 %v133
    %395 = vmatpush.msra.mxu0 %v132
    %396 = vmatpush.msra.mxu0 %v131
    %397 = vmatpush.msra.mxu0 %v130
    %398 = vmatpush.msra.mxu0 %v129
    %399 = vmatpush.msra.mxu0 %v128
    %400 = vmatpush.msra.mxu0 %v127
    %401 = vmatpush.msra.mxu0 %v126
    %402 = vmatpush.msra.mxu0 %v125
    %403 = vmatpush.msra.mxu0 %v124
    %404 = vmatpush.msra.mxu0 %v123
    %405 = vmatpush.msra.mxu0 %v122
    %406 = vmatpush.msra.mxu0 %v121
    %407 = vmatmul.f32.gmra.mxu0 %v305
    %v408 = vpop.f32.mrf.mxu0
    %v409 = vadd.f32 0.0, %v408
    %410 = vdwg.mxu0
    %v411 = vadd.f32 %v390, %v409
    %v412 = vtanh.pop %v411
    %v413 = vmul.f32 %v389, %v262
    %v414 = vmul.f32 %v348, %v412
    %v415 = vadd.f32 %v413, %v414
    %v416 = vtanh.pop %v415
    %v417 = vld [vmem:[%s307 + $0x18] sm:$0xff]
    %418 = vmatpush.msra.mxu0 %v152
    %419 = vmatpush.msra.mxu0 %v151
    %420 = vmatpush.msra.mxu0 %v150
    %421 = vmatpush.msra.mxu0 %v149
    %422 = vmatpush.msra.mxu0 %v148
    %423 = vmatpush.msra.mxu0 %v147
    %424 = vmatpush.msra.mxu0 %v146
    %425 = vmatpush.msra.mxu0 %v145
    %426 = vmatpush.msra.mxu0 %v144
    %427 = vmatpush.msra.mxu0 %v143
    %428 = vmatpush.msra.mxu0 %v142
    %429 = vmatpush.msra.mxu0 %v141
    %430 = vmatpush.msra.mxu0 %v140
    %431 = vmatpush.msra.mxu0 %v139
    %432 = vmatpush.msra.mxu0 %v138
    %433 = vmatpush.msra.mxu0 %v137
    %434 = vmatmul.f32.gmra.mxu0 %v305
    %v435 = vpop.f32.mrf.mxu0
    %v436 = vadd.f32 0.0, %v435
    %437 = vdwg.mxu0
    %v438 = vadd.f32 %v417, %v436
    %v439 = vxor.u32 %v438, 2147483648
    %v440 = vmul.f32 %v439, 1.442695
    %v441 = vpow.pop %v440
    %v442 = vadd.f32 %v441, 1.0
    %v443 = vrcp.pop %v442
    %v444 = vmul.f32 %v442, %v443
    %v445 = vsub.f32 1.0, %v444
    %v446 = vmul.f32 %v443, %v445
    %v447 = vadd.f32 %v443, %v446
    %vm448 = vweird.f32 %v442
    %vm449 = vweird.f32 %v443
    %vm450 = vmor %vm448, %vm449
    %v451 = vsel %vm450, %v443, %v447
    %v452 = vand.u32 2147483647, %v442
    %vm453 = vcmp.eq.f32.partialorder %v452, 8.507059e+37
    %v454 = vand.u32 %v442, 2147483648
    %v455 = vor.u32 1.1754944e-38, %v454
    %v456 = vsel %vm453, %v455, %v451
    %v457 = vmul.f32 1.0, %v456
    %v458 = vmul.f32 %v457, %v416
    %s459 = scalar_lea.vmem [#allocation10], 8
    %460 = vst [vmem:[%s459] sm:$0xff] %v458
    %s461 = scalar_lea.vmem [#allocation2], 64
    %v462 = vld [vmem:[%s461] sm:$0xff]
    %463 = vmatpush.msra.mxu0 %v104
    %464 = vmatpush.msra.mxu0 %v103
    %465 = vmatpush.msra.mxu0 %v102
    %466 = vmatpush.msra.mxu0 %v101
    %467 = vmatpush.msra.mxu0 %v100
    %468 = vmatpush.msra.mxu0 %v99
    %469 = vmatpush.msra.mxu0 %v98
    %470 = vmatpush.msra.mxu0 %v97
    %471 = vmatpush.msra.mxu0 %v96
    %472 = vmatpush.msra.mxu0 %v95
    %473 = vmatpush.msra.mxu0 %v94
    %474 = vmatpush.msra.mxu0 %v93
    %475 = vmatpush.msra.mxu0 %v92
    %476 = vmatpush.msra.mxu0 %v91
    %477 = vmatpush.msra.mxu0 %v90
    %478 = vmatpush.msra.mxu0 %v89
    %479 = vmatmul.f32.gmra.mxu0 %v458
    %v480 = vpop.f32.mrf.mxu0
    %v481 = vadd.f32 0.0, %v480
    %482 = vdwg.mxu0
    %v483 = vadd.f32 %v462, %v481
    %v484 = vxor.u32 %v483, 2147483648
    %v485 = vmul.f32 %v484, 1.442695
    %v486 = vpow.pop %v485
    %v487 = vadd.f32 %v486, 1.0
    %v488 = vrcp.pop %v487
    %v489 = vmul.f32 %v487, %v488
    %v490 = vsub.f32 1.0, %v489
    %v491 = vmul.f32 %v488, %v490
    %v492 = vadd.f32 %v488, %v491
    %vm493 = vweird.f32 %v487
    %vm494 = vweird.f32 %v488
    %vm495 = vmor %vm493, %vm494
    %v496 = vsel %vm495, %v488, %v492
    %v497 = vand.u32 2147483647, %v487
    %vm498 = vcmp.eq.f32.partialorder %v497, 8.507059e+37
    %v499 = vand.u32 %v487, 2147483648
    %v500 = vor.u32 1.1754944e-38, %v499
    %v501 = vsel %vm498, %v500, %v496
    %v502 = vmul.f32 1.0, %v501
    %v503 = vld [vmem:[%s461 + $0x8] sm:$0xff]
    %504 = vmatpush.msra.mxu0 %v120
    %505 = vmatpush.msra.mxu0 %v119
    %506 = vmatpush.msra.mxu0 %v118
    %507 = vmatpush.msra.mxu0 %v117
    %508 = vmatpush.msra.mxu0 %v116
    %509 = vmatpush.msra.mxu0 %v115
    %510 = vmatpush.msra.mxu0 %v114
    %511 = vmatpush.msra.mxu0 %v113
    %512 = vmatpush.msra.mxu0 %v112
    %513 = vmatpush.msra.mxu0 %v111
    %514 = vmatpush.msra.mxu0 %v110
    %515 = vmatpush.msra.mxu0 %v109
    %516 = vmatpush.msra.mxu0 %v108
    %517 = vmatpush.msra.mxu0 %v107
    %518 = vmatpush.msra.mxu0 %v106
    %519 = vmatpush.msra.mxu0 %v105
    %520 = vmatmul.f32.gmra.mxu0 %v458
    %v521 = vpop.f32.mrf.mxu0
    %v522 = vadd.f32 0.0, %v521
    %523 = vdwg.mxu0
    %v524 = vadd.f32 %v503, %v522
    %v525 = vxor.u32 %v524, 2147483648
    %v526 = vmul.f32 %v525, 1.442695
    %v527 = vpow.pop %v526
    %v528 = vadd.f32 %v527, 1.0
    %v529 = vrcp.pop %v528
    %v530 = vmul.f32 %v528, %v529
    %v531 = vsub.f32 1.0, %v530
    %v532 = vmul.f32 %v529, %v531
    %v533 = vadd.f32 %v529, %v532
    %vm534 = vweird.f32 %v528
    %vm535 = vweird.f32 %v529
    %vm536 = vmor %vm534, %vm535
    %v537 = vsel %vm536, %v529, %v533
    %v538 = vand.u32 2147483647, %v528
    %vm539 = vcmp.eq.f32.partialorder %v538, 8.507059e+37
    %v540 = vand.u32 %v528, 2147483648
    %v541 = vor.u32 1.1754944e-38, %v540
    %v542 = vsel %vm539, %v541, %v537
    %v543 = vmul.f32 1.0, %v542
    %v544 = vld [vmem:[%s461 + $0x10] sm:$0xff]
    %545 = vmatpush.msra.mxu0 %v136
    %546 = vmatpush.msra.mxu0 %v135
    %547 = vmatpush.msra.mxu0 %v134
    %548 = vmatpush.msra.mxu0 %v133
    %549 = vmatpush.msra.mxu0 %v132
    %550 = vmatpush.msra.mxu0 %v131
    %551 = vmatpush.msra.mxu0 %v130
    %552 = vmatpush.msra.mxu0 %v129
    %553 = vmatpush.msra.mxu0 %v128
    %554 = vmatpush.msra.mxu0 %v127
    %555 = vmatpush.msra.mxu0 %v126
    %556 = vmatpush.msra.mxu0 %v125
    %557 = vmatpush.msra.mxu0 %v124
    %558 = vmatpush.msra.mxu0 %v123
    %559 = vmatpush.msra.mxu0 %v122
    %560 = vmatpush.msra.mxu0 %v121
    %561 = vmatmul.f32.gmra.mxu0 %v458
    %v562 = vpop.f32.mrf.mxu0
    %v563 = vadd.f32 0.0, %v562
    %564 = vdwg.mxu0
    %v565 = vadd.f32 %v544, %v563
    %v566 = vtanh.pop %v565
    %v567 = vmul.f32 %v543, %v415
    %v568 = vmul.f32 %v502, %v566
    %v569 = vadd.f32 %v567, %v568
    %v570 = vtanh.pop %v569
    %v571 = vld [vmem:[%s461 + $0x18] sm:$0xff]
    %572 = vmatpush.msra.mxu0 %v152
    %573 = vmatpush.msra.mxu0 %v151
    %574 = vmatpush.msra.mxu0 %v150
    %575 = vmatpush.msra.mxu0 %v149
    %576 = vmatpush.msra.mxu0 %v148
    %577 = vmatpush.msra.mxu0 %v147
    %578 = vmatpush.msra.mxu0 %v146
    %579 = vmatpush.msra.mxu0 %v145
    %580 = vmatpush.msra.mxu0 %v144
    %581 = vmatpush.msra.mxu0 %v143
    %582 = vmatpush.msra.mxu0 %v142
    %583 = vmatpush.msra.mxu0 %v141
    %584 = vmatpush.msra.mxu0 %v140
    %585 = vmatpush.msra.mxu0 %v139
    %586 = vmatpush.msra.mxu0 %v138
    %587 = vmatpush.msra.mxu0 %v137
    %588 = vmatmul.f32.gmra.mxu0 %v458
    %v589 = vpop.f32.mrf.mxu0
    %v590 = vadd.f32 0.0, %v589
    %591 = vdwg.mxu0
    %v592 = vadd.f32 %v571, %v590
    %v593 = vxor.u32 %v592, 2147483648
    %v594 = vmul.f32 %v593, 1.442695
    %v595 = vpow.pop %v594
    %v596 = vadd.f32 %v595, 1.0
    %v597 = vrcp.pop %v596
    %v598 = vmul.f32 %v596, %v597
    %v599 = vsub.f32 1.0, %v598
    %v600 = vmul.f32 %v597, %v599
    %v601 = vadd.f32 %v597, %v600
    %vm602 = vweird.f32 %v596
    %vm603 = vweird.f32 %v597
    %vm604 = vmor %vm602, %vm603
    %v605 = vsel %vm604, %v597, %v601
    %v606 = vand.u32 2147483647, %v596
    %vm607 = vcmp.eq.f32.partialorder %v606, 8.507059e+37
    %v608 = vand.u32 %v596, 2147483648
    %v609 = vor.u32 1.1754944e-38, %v608
    %v610 = vsel %vm607, %v609, %v605
    %v611 = vmul.f32 1.0, %v610
    %v612 = vmul.f32 %v611, %v570
    %s613 = scalar_lea.vmem [#allocation10], 16
    %614 = vst [vmem:[%s613] sm:$0xff] %v612
    %s615 = scalar_lea.vmem [#allocation2], 96
    %v616 = vld [vmem:[%s615] sm:$0xff]
    %617 = vmatpush.msra.mxu0 %v104
    %618 = vmatpush.msra.mxu0 %v103
    %619 = vmatpush.msra.mxu0 %v102
    %620 = vmatpush.msra.mxu0 %v101
    %621 = vmatpush.msra.mxu0 %v100
    %622 = vmatpush.msra.mxu0 %v99
    %623 = vmatpush.msra.mxu0 %v98
    %624 = vmatpush.msra.mxu0 %v97
    %625 = vmatpush.msra.mxu0 %v96
    %626 = vmatpush.msra.mxu0 %v95
    %627 = vmatpush.msra.mxu0 %v94
    %628 = vmatpush.msra.mxu0 %v93
    %629 = vmatpush.msra.mxu0 %v92
    %630 = vmatpush.msra.mxu0 %v91
    %631 = vmatpush.msra.mxu0 %v90
    %632 = vmatpush.msra.mxu0 %v89
    %633 = vmatmul.f32.gmra.mxu0 %v612
    %v634 = vpop.f32.mrf.mxu0
    %v635 = vadd.f32 0.0, %v634
    %636 = vdwg.mxu0
    %v637 = vadd.f32 %v616, %v635
    %v638 = vxor.u32 %v637, 2147483648
    %v639 = vmul.f32 %v638, 1.442695
    %v640 = vpow.pop %v639
    %v641 = vadd.f32 %v640, 1.0
    %v642 = vrcp.pop %v641
    %v643 = vmul.f32 %v641, %v642
    %v644 = vsub.f32 1.0, %v643
    %v645 = vmul.f32 %v642, %v644
    %v646 = vadd.f32 %v642, %v645
    %vm647 = vweird.f32 %v641
    %vm648 = vweird.f32 %v642
    %vm649 = vmor %vm647, %vm648
    %v650 = vsel %vm649, %v642, %v646
    %v651 = vand.u32 2147483647, %v641
    %vm652 = vcmp.eq.f32.partialorder %v651, 8.507059e+37
    %v653 = vand.u32 %v641, 2147483648
    %v654 = vor.u32 1.1754944e-38, %v653
    %v655 = vsel %vm652, %v654, %v650
    %v656 = vmul.f32 1.0, %v655
    %v657 = vld [vmem:[%s615 + $0x8] sm:$0xff]
    %658 = vmatpush.msra.mxu0 %v120
    %659 = vmatpush.msra.mxu0 %v119
    %660 = vmatpush.msra.mxu0 %v118
    %661 = vmatpush.msra.mxu0 %v117
    %662 = vmatpush.msra.mxu0 %v116
    %663 = vmatpush.msra.mxu0 %v115
    %664 = vmatpush.msra.mxu0 %v114
    %665 = vmatpush.msra.mxu0 %v113
    %666 = vmatpush.msra.mxu0 %v112
    %667 = vmatpush.msra.mxu0 %v111
    %668 = vmatpush.msra.mxu0 %v110
    %669 = vmatpush.msra.mxu0 %v109
    %670 = vmatpush.msra.mxu0 %v108
    %671 = vmatpush.msra.mxu0 %v107
    %672 = vmatpush.msra.mxu0 %v106
    %673 = vmatpush.msra.mxu0 %v105
    %674 = vmatmul.f32.gmra.mxu0 %v612
    %v675 = vpop.f32.mrf.mxu0
    %v676 = vadd.f32 0.0, %v675
    %677 = vdwg.mxu0
    %v678 = vadd.f32 %v657, %v676
    %v679 = vxor.u32 %v678, 2147483648
    %v680 = vmul.f32 %v679, 1.442695
    %v681 = vpow.pop %v680
    %v682 = vadd.f32 %v681, 1.0
    %v683 = vrcp.pop %v682
    %v684 = vmul.f32 %v682, %v683
    %v685 = vsub.f32 1.0, %v684
    %v686 = vmul.f32 %v683, %v685
    %v687 = vadd.f32 %v683, %v686
    %vm688 = vweird.f32 %v682
    %vm689 = vweird.f32 %v683
    %vm690 = vmor %vm688, %vm689
    %v691 = vsel %vm690, %v683, %v687
    %v692 = vand.u32 2147483647, %v682
    %vm693 = vcmp.eq.f32.partialorder %v692, 8.507059e+37
    %v694 = vand.u32 %v682, 2147483648
    %v695 = vor.u32 1.1754944e-38, %v694
    %v696 = vsel %vm693, %v695, %v691
    %v697 = vmul.f32 1.0, %v696
    %v698 = vld [vmem:[%s615 + $0x10] sm:$0xff]
    %699 = vmatpush.msra.mxu0 %v136
    %700 = vmatpush.msra.mxu0 %v135
    %701 = vmatpush.msra.mxu0 %v134
    %702 = vmatpush.msra.mxu0 %v133
    %703 = vmatpush.msra.mxu0 %v132
    %704 = vmatpush.msra.mxu0 %v131
    %705 = vmatpush.msra.mxu0 %v130
    %706 = vmatpush.msra.mxu0 %v129
    %707 = vmatpush.msra.mxu0 %v128
    %708 = vmatpush.msra.mxu0 %v127
    %709 = vmatpush.msra.mxu0 %v126
    %710 = vmatpush.msra.mxu0 %v125
    %711 = vmatpush.msra.mxu0 %v124
    %712 = vmatpush.msra.mxu0 %v123
    %713 = vmatpush.msra.mxu0 %v122
    %714 = vmatpush.msra.mxu0 %v121
    %715 = vmatmul.f32.gmra.mxu0 %v612
    %v716 = vpop.f32.mrf.mxu0
    %v717 = vadd.f32 0.0, %v716
    %718 = vdwg.mxu0
    %v719 = vadd.f32 %v698, %v717
    %v720 = vtanh.pop %v719
    %v721 = vmul.f32 %v697, %v569
    %v722 = vmul.f32 %v656, %v720
    %v723 = vadd.f32 %v721, %v722
    %v724 = vtanh.pop %v723
    %v725 = vld [vmem:[%s615 + $0x18] sm:$0xff]
    %726 = vmatpush.msra.mxu0 %v152
    %727 = vmatpush.msra.mxu0 %v151
    %728 = vmatpush.msra.mxu0 %v150
    %729 = vmatpush.msra.mxu0 %v149
    %730 = vmatpush.msra.mxu0 %v148
    %731 = vmatpush.msra.mxu0 %v147
    %732 = vmatpush.msra.mxu0 %v146
    %733 = vmatpush.msra.mxu0 %v145
    %734 = vmatpush.msra.mxu0 %v144
    %735 = vmatpush.msra.mxu0 %v143
    %736 = vmatpush.msra.mxu0 %v142
    %737 = vmatpush.msra.mxu0 %v141
    %738 = vmatpush.msra.mxu0 %v140
    %739 = vmatpush.msra.mxu0 %v139
    %740 = vmatpush.msra.mxu0 %v138
    %741 = vmatpush.msra.mxu0 %v137
    %742 = vmatmul.f32.gmra.mxu0 %v612
    %v743 = vpop.f32.mrf.mxu0
    %v744 = vadd.f32 0.0, %v743
    %745 = vdwg.mxu0
    %v746 = vadd.f32 %v725, %v744
    %v747 = vxor.u32 %v746, 2147483648
    %v748 = vmul.f32 %v747, 1.442695
    %v749 = vpow.pop %v748
    %v750 = vadd.f32 %v749, 1.0
    %v751 = vrcp.pop %v750
    %v752 = vmul.f32 %v750, %v751
    %v753 = vsub.f32 1.0, %v752
    %v754 = vmul.f32 %v751, %v753
    %v755 = vadd.f32 %v751, %v754
    %vm756 = vweird.f32 %v750
    %vm757 = vweird.f32 %v751
    %vm758 = vmor %vm756, %vm757
    %v759 = vsel %vm758, %v751, %v755
    %v760 = vand.u32 2147483647, %v750
    %vm761 = vcmp.eq.f32.partialorder %v760, 8.507059e+37
    %v762 = vand.u32 %v750, 2147483648
    %v763 = vor.u32 1.1754944e-38, %v762
    %v764 = vsel %vm761, %v763, %v759
    %v765 = vmul.f32 1.0, %v764
    %v766 = vmul.f32 %v765, %v724
    %s767 = scalar_lea.vmem [#allocation10], 24
    %768 = vst [vmem:[%s767] sm:$0xff] %v766
    %s769 = scalar_lea.vmem [#allocation2], 128
    %v770 = vld [vmem:[%s769] sm:$0xff]
    %771 = vmatpush.msra.mxu0 %v104
    %772 = vmatpush.msra.mxu0 %v103
    %773 = vmatpush.msra.mxu0 %v102
    %774 = vmatpush.msra.mxu0 %v101
    %775 = vmatpush.msra.mxu0 %v100
    %776 = vmatpush.msra.mxu0 %v99
    %777 = vmatpush.msra.mxu0 %v98
    %778 = vmatpush.msra.mxu0 %v97
    %779 = vmatpush.msra.mxu0 %v96
    %780 = vmatpush.msra.mxu0 %v95
    %781 = vmatpush.msra.mxu0 %v94
    %782 = vmatpush.msra.mxu0 %v93
    %783 = vmatpush.msra.mxu0 %v92
    %784 = vmatpush.msra.mxu0 %v91
    %785 = vmatpush.msra.mxu0 %v90
    %786 = vmatpush.msra.mxu0 %v89
    %787 = vmatmul.f32.gmra.mxu0 %v766
    %v788 = vpop.f32.mrf.mxu0
    %v789 = vadd.f32 0.0, %v788
    %790 = vdwg.mxu0
    %v791 = vadd.f32 %v770, %v789
    %v792 = vxor.u32 %v791, 2147483648
    %v793 = vmul.f32 %v792, 1.442695
    %v794 = vpow.pop %v793
    %v795 = vadd.f32 %v794, 1.0
    %v796 = vrcp.pop %v795
    %v797 = vmul.f32 %v795, %v796
    %v798 = vsub.f32 1.0, %v797
    %v799 = vmul.f32 %v796, %v798
    %v800 = vadd.f32 %v796, %v799
    %vm801 = vweird.f32 %v795
    %vm802 = vweird.f32 %v796
    %vm803 = vmor %vm801, %vm802
    %v804 = vsel %vm803, %v796, %v800
    %v805 = vand.u32 2147483647, %v795
    %vm806 = vcmp.eq.f32.partialorder %v805, 8.507059e+37
    %v807 = vand.u32 %v795, 2147483648
    %v808 = vor.u32 1.1754944e-38, %v807
    %v809 = vsel %vm806, %v808, %v804
    %v810 = vmul.f32 1.0, %v809
    %v811 = vld [vmem:[%s769 + $0x8] sm:$0xff]
    %812 = vmatpush.msra.mxu0 %v120
    %813 = vmatpush.msra.mxu0 %v119
    %814 = vmatpush.msra.mxu0 %v118
    %815 = vmatpush.msra.mxu0 %v117
    %816 = vmatpush.msra.mxu0 %v116
    %817 = vmatpush.msra.mxu0 %v115
    %818 = vmatpush.msra.mxu0 %v114
    %819 = vmatpush.msra.mxu0 %v113
    %820 = vmatpush.msra.mxu0 %v112
    %821 = vmatpush.msra.mxu0 %v111
    %822 = vmatpush.msra.mxu0 %v110
    %823 = vmatpush.msra.mxu0 %v109
    %824 = vmatpush.msra.mxu0 %v108
    %825 = vmatpush.msra.mxu0 %v107
    %826 = vmatpush.msra.mxu0 %v106
    %827 = vmatpush.msra.mxu0 %v105
    %828 = vmatmul.f32.gmra.mxu0 %v766
    %v829 = vpop.f32.mrf.mxu0
    %v830 = vadd.f32 0.0, %v829
    %831 = vdwg.mxu0
    %v832 = vadd.f32 %v811, %v830
    %v833 = vxor.u32 %v832, 2147483648
    %v834 = vmul.f32 %v833, 1.442695
    %v835 = vpow.pop %v834
    %v836 = vadd.f32 %v835, 1.0
    %v837 = vrcp.pop %v836
    %v838 = vmul.f32 %v836, %v837
    %v839 = vsub.f32 1.0, %v838
    %v840 = vmul.f32 %v837, %v839
    %v841 = vadd.f32 %v837, %v840
    %vm842 = vweird.f32 %v836
    %vm843 = vweird.f32 %v837
    %vm844 = vmor %vm842, %vm843
    %v845 = vsel %vm844, %v837, %v841
    %v846 = vand.u32 2147483647, %v836
    %vm847 = vcmp.eq.f32.partialorder %v846, 8.507059e+37
    %v848 = vand.u32 %v836, 2147483648
    %v849 = vor.u32 1.1754944e-38, %v848
    %v850 = vsel %vm847, %v849, %v845
    %v851 = vmul.f32 1.0, %v850
    %v852 = vld [vmem:[%s769 + $0x10] sm:$0xff]
    %853 = vmatpush.msra.mxu0 %v136
    %854 = vmatpush.msra.mxu0 %v135
    %855 = vmatpush.msra.mxu0 %v134
    %856 = vmatpush.msra.mxu0 %v133
    %857 = vmatpush.msra.mxu0 %v132
    %858 = vmatpush.msra.mxu0 %v131
    %859 = vmatpush.msra.mxu0 %v130
    %860 = vmatpush.msra.mxu0 %v129
    %861 = vmatpush.msra.mxu0 %v128
    %862 = vmatpush.msra.mxu0 %v127
    %863 = vmatpush.msra.mxu0 %v126
    %864 = vmatpush.msra.mxu0 %v125
    %865 = vmatpush.msra.mxu0 %v124
    %866 = vmatpush.msra.mxu0 %v123
    %867 = vmatpush.msra.mxu0 %v122
    %868 = vmatpush.msra.mxu0 %v121
    %869 = vmatmul.f32.gmra.mxu0 %v766
    %v870 = vpop.f32.mrf.mxu0
    %v871 = vadd.f32 0.0, %v870
    %872 = vdwg.mxu0
    %v873 = vadd.f32 %v852, %v871
    %v874 = vtanh.pop %v873
    %v875 = vmul.f32 %v851, %v723
    %v876 = vmul.f32 %v810, %v874
    %v877 = vadd.f32 %v875, %v876
    %v878 = vtanh.pop %v877
    %v879 = vld [vmem:[%s769 + $0x18] sm:$0xff]
    %880 = vmatpush.msra.mxu0 %v152
    %881 = vmatpush.msra.mxu0 %v151
    %882 = vmatpush.msra.mxu0 %v150
    %883 = vmatpush.msra.mxu0 %v149
    %884 = vmatpush.msra.mxu0 %v148
    %885 = vmatpush.msra.mxu0 %v147
    %886 = vmatpush.msra.mxu0 %v146
    %887 = vmatpush.msra.mxu0 %v145
    %888 = vmatpush.msra.mxu0 %v144
    %889 = vmatpush.msra.mxu0 %v143
    %890 = vmatpush.msra.mxu0 %v142
    %891 = vmatpush.msra.mxu0 %v141
    %892 = vmatpush.msra.mxu0 %v140
    %893 = vmatpush.msra.mxu0 %v139
    %894 = vmatpush.msra.mxu0 %v138
    %895 = vmatpush.msra.mxu0 %v137
    %896 = vmatmul.f32.gmra.mxu0 %v766
    %v897 = vpop.f32.mrf.mxu0
    %v898 = vadd.f32 0.0, %v897
    %899 = vdwg.mxu0
    %v900 = vadd.f32 %v879, %v898
    %v901 = vxor.u32 %v900, 2147483648
    %v902 = vmul.f32 %v901, 1.442695
    %v903 = vpow.pop %v902
    %v904 = vadd.f32 %v903, 1.0
    %v905 = vrcp.pop %v904
    %v906 = vmul.f32 %v904, %v905
    %v907 = vsub.f32 1.0, %v906
    %v908 = vmul.f32 %v905, %v907
    %v909 = vadd.f32 %v905, %v908
    %vm910 = vweird.f32 %v904
    %vm911 = vweird.f32 %v905
    %vm912 = vmor %vm910, %vm911
    %v913 = vsel %vm912, %v905, %v909
    %v914 = vand.u32 2147483647, %v904
    %vm915 = vcmp.eq.f32.partialorder %v914, 8.507059e+37
    %v916 = vand.u32 %v904, 2147483648
    %v917 = vor.u32 1.1754944e-38, %v916
    %v918 = vsel %vm915, %v917, %v913
    %v919 = vmul.f32 1.0, %v918
    %v920 = vmul.f32 %v919, %v878
    %s921 = scalar_lea.vmem [#allocation10], 32
    %922 = vst [vmem:[%s921] sm:$0xff] %v920
    %s923 = scalar_lea.vmem [#allocation2], 160
    %v924 = vld [vmem:[%s923] sm:$0xff]
    %925 = vmatpush.msra.mxu0 %v104
    %926 = vmatpush.msra.mxu0 %v103
    %927 = vmatpush.msra.mxu0 %v102
    %928 = vmatpush.msra.mxu0 %v101
    %929 = vmatpush.msra.mxu0 %v100
    %930 = vmatpush.msra.mxu0 %v99
    %931 = vmatpush.msra.mxu0 %v98
    %932 = vmatpush.msra.mxu0 %v97
    %933 = vmatpush.msra.mxu0 %v96
    %934 = vmatpush.msra.mxu0 %v95
    %935 = vmatpush.msra.mxu0 %v94
    %936 = vmatpush.msra.mxu0 %v93
    %937 = vmatpush.msra.mxu0 %v92
    %938 = vmatpush.msra.mxu0 %v91
    %939 = vmatpush.msra.mxu0 %v90
    %940 = vmatpush.msra.mxu0 %v89
    %941 = vmatmul.f32.gmra.mxu0 %v920
    %v942 = vpop.f32.mrf.mxu0
    %v943 = vadd.f32 0.0, %v942
    %944 = vdwg.mxu0
    %v945 = vadd.f32 %v924, %v943
    %v946 = vxor.u32 %v945, 2147483648
    %v947 = vmul.f32 %v946, 1.442695
    %v948 = vpow.pop %v947
    %v949 = vadd.f32 %v948, 1.0
    %v950 = vrcp.pop %v949
    %v951 = vmul.f32 %v949, %v950
    %v952 = vsub.f32 1.0, %v951
    %v953 = vmul.f32 %v950, %v952
    %v954 = vadd.f32 %v950, %v953
    %vm955 = vweird.f32 %v949
    %vm956 = vweird.f32 %v950
    %vm957 = vmor %vm955, %vm956
    %v958 = vsel %vm957, %v950, %v954
    %v959 = vand.u32 2147483647, %v949
    %vm960 = vcmp.eq.f32.partialorder %v959, 8.507059e+37
    %v961 = vand.u32 %v949, 2147483648
    %v962 = vor.u32 1.1754944e-38, %v961
    %v963 = vsel %vm960, %v962, %v958
    %v964 = vmul.f32 1.0, %v963
    %v965 = vld [vmem:[%s923 + $0x8] sm:$0xff]
    %966 = vmatpush.msra.mxu0 %v120
    %967 = vmatpush.msra.mxu0 %v119
    %968 = vmatpush.msra.mxu0 %v118
    %969 = vmatpush.msra.mxu0 %v117
    %970 = vmatpush.msra.mxu0 %v116
    %971 = vmatpush.msra.mxu0 %v115
    %972 = vmatpush.msra.mxu0 %v114
    %973 = vmatpush.msra.mxu0 %v113
    %974 = vmatpush.msra.mxu0 %v112
    %975 = vmatpush.msra.mxu0 %v111
    %976 = vmatpush.msra.mxu0 %v110
    %977 = vmatpush.msra.mxu0 %v109
    %978 = vmatpush.msra.mxu0 %v108
    %979 = vmatpush.msra.mxu0 %v107
    %980 = vmatpush.msra.mxu0 %v106
    %981 = vmatpush.msra.mxu0 %v105
    %982 = vmatmul.f32.gmra.mxu0 %v920
    %v983 = vpop.f32.mrf.mxu0
    %v984 = vadd.f32 0.0, %v983
    %985 = vdwg.mxu0
    %v986 = vadd.f32 %v965, %v984
    %v987 = vxor.u32 %v986, 2147483648
    %v988 = vmul.f32 %v987, 1.442695
    %v989 = vpow.pop %v988
    %v990 = vadd.f32 %v989, 1.0
    %v991 = vrcp.pop %v990
    %v992 = vmul.f32 %v990, %v991
    %v993 = vsub.f32 1.0, %v992
    %v994 = vmul.f32 %v991, %v993
    %v995 = vadd.f32 %v991, %v994
    %vm996 = vweird.f32 %v990
    %vm997 = vweird.f32 %v991
    %vm998 = vmor %vm996, %vm997
    %v999 = vsel %vm998, %v991, %v995
    %v1000 = vand.u32 2147483647, %v990
    %vm1001 = vcmp.eq.f32.partialorder %v1000, 8.507059e+37
    %v1002 = vand.u32 %v990, 2147483648
    %v1003 = vor.u32 1.1754944e-38, %v1002
    %v1004 = vsel %vm1001, %v1003, %v999
    %v1005 = vmul.f32 1.0, %v1004
    %v1006 = vld [vmem:[%s923 + $0x10] sm:$0xff]
    %1007 = vmatpush.msra.mxu0 %v136
    %1008 = vmatpush.msra.mxu0 %v135
    %1009 = vmatpush.msra.mxu0 %v134
    %1010 = vmatpush.msra.mxu0 %v133
    %1011 = vmatpush.msra.mxu0 %v132
    %1012 = vmatpush.msra.mxu0 %v131
    %1013 = vmatpush.msra.mxu0 %v130
    %1014 = vmatpush.msra.mxu0 %v129
    %1015 = vmatpush.msra.mxu0 %v128
    %1016 = vmatpush.msra.mxu0 %v127
    %1017 = vmatpush.msra.mxu0 %v126
    %1018 = vmatpush.msra.mxu0 %v125
    %1019 = vmatpush.msra.mxu0 %v124
    %1020 = vmatpush.msra.mxu0 %v123
    %1021 = vmatpush.msra.mxu0 %v122
    %1022 = vmatpush.msra.mxu0 %v121
    %1023 = vmatmul.f32.gmra.mxu0 %v920
    %v1024 = vpop.f32.mrf.mxu0
    %v1025 = vadd.f32 0.0, %v1024
    %1026 = vdwg.mxu0
    %v1027 = vadd.f32 %v1006, %v1025
    %v1028 = vtanh.pop %v1027
    %v1029 = vmul.f32 %v1005, %v877
    %v1030 = vmul.f32 %v964, %v1028
    %v1031 = vadd.f32 %v1029, %v1030
    %v1032 = vtanh.pop %v1031
    %v1033 = vld [vmem:[%s923 + $0x18] sm:$0xff]
    %1034 = vmatpush.msra.mxu0 %v152
    %1035 = vmatpush.msra.mxu0 %v151
    %1036 = vmatpush.msra.mxu0 %v150
    %1037 = vmatpush.msra.mxu0 %v149
    %1038 = vmatpush.msra.mxu0 %v148
    %1039 = vmatpush.msra.mxu0 %v147
    %1040 = vmatpush.msra.mxu0 %v146
    %1041 = vmatpush.msra.mxu0 %v145
    %1042 = vmatpush.msra.mxu0 %v144
    %1043 = vmatpush.msra.mxu0 %v143
    %1044 = vmatpush.msra.mxu0 %v142
    %1045 = vmatpush.msra.mxu0 %v141
    %1046 = vmatpush.msra.mxu0 %v140
    %1047 = vmatpush.msra.mxu0 %v139
    %1048 = vmatpush.msra.mxu0 %v138
    %1049 = vmatpush.msra.mxu0 %v137
    %1050 = vmatmul.f32.gmra.mxu0 %v920
    %v1051 = vpop.f32.mrf.mxu0
    %v1052 = vadd.f32 0.0, %v1051
    %1053 = vdwg.mxu0
    %v1054 = vadd.f32 %v1033, %v1052
    %v1055 = vxor.u32 %v1054, 2147483648
    %v1056 = vmul.f32 %v1055, 1.442695
    %v1057 = vpow.pop %v1056
    %v1058 = vadd.f32 %v1057, 1.0
    %v1059 = vrcp.pop %v1058
    %v1060 = vmul.f32 %v1058, %v1059
    %v1061 = vsub.f32 1.0, %v1060
    %v1062 = vmul.f32 %v1059, %v1061
    %v1063 = vadd.f32 %v1059, %v1062
    %vm1064 = vweird.f32 %v1058
    %vm1065 = vweird.f32 %v1059
    %vm1066 = vmor %vm1064, %vm1065
    %v1067 = vsel %vm1066, %v1059, %v1063
    %v1068 = vand.u32 2147483647, %v1058
    %vm1069 = vcmp.eq.f32.partialorder %v1068, 8.507059e+37
    %v1070 = vand.u32 %v1058, 2147483648
    %v1071 = vor.u32 1.1754944e-38, %v1070
    %v1072 = vsel %vm1069, %v1071, %v1067
    %v1073 = vmul.f32 1.0, %v1072
    %v1074 = vmul.f32 %v1073, %v1032
    %s1075 = scalar_lea.vmem [#allocation10], 40
    %1076 = vst [vmem:[%s1075] sm:$0xff] %v1074
    %s1077 = scalar_lea.vmem [#allocation2], 192
    %v1078 = vld [vmem:[%s1077] sm:$0xff]
    %1079 = vmatpush.msra.mxu0 %v104
    %1080 = vmatpush.msra.mxu0 %v103
    %1081 = vmatpush.msra.mxu0 %v102
    %1082 = vmatpush.msra.mxu0 %v101
    %1083 = vmatpush.msra.mxu0 %v100
    %1084 = vmatpush.msra.mxu0 %v99
    %1085 = vmatpush.msra.mxu0 %v98
    %1086 = vmatpush.msra.mxu0 %v97
    %1087 = vmatpush.msra.mxu0 %v96
    %1088 = vmatpush.msra.mxu0 %v95
    %1089 = vmatpush.msra.mxu0 %v94
    %1090 = vmatpush.msra.mxu0 %v93
    %1091 = vmatpush.msra.mxu0 %v92
    %1092 = vmatpush.msra.mxu0 %v91
    %1093 = vmatpush.msra.mxu0 %v90
    %1094 = vmatpush.msra.mxu0 %v89
    %1095 = vmatmul.f32.gmra.mxu0 %v1074
    %v1096 = vpop.f32.mrf.mxu0
    %v1097 = vadd.f32 0.0, %v1096
    %1098 = vdwg.mxu0
    %v1099 = vadd.f32 %v1078, %v1097
    %v1100 = vxor.u32 %v1099, 2147483648
    %v1101 = vmul.f32 %v1100, 1.442695
    %v1102 = vpow.pop %v1101
    %v1103 = vadd.f32 %v1102, 1.0
    %v1104 = vrcp.pop %v1103
    %v1105 = vmul.f32 %v1103, %v1104
    %v1106 = vsub.f32 1.0, %v1105
    %v1107 = vmul.f32 %v1104, %v1106
    %v1108 = vadd.f32 %v1104, %v1107
    %vm1109 = vweird.f32 %v1103
    %vm1110 = vweird.f32 %v1104
    %vm1111 = vmor %vm1109, %vm1110
    %v1112 = vsel %vm1111, %v1104, %v1108
    %v1113 = vand.u32 2147483647, %v1103
    %vm1114 = vcmp.eq.f32.partialorder %v1113, 8.507059e+37
    %v1115 = vand.u32 %v1103, 2147483648
    %v1116 = vor.u32 1.1754944e-38, %v1115
    %v1117 = vsel %vm1114, %v1116, %v1112
    %v1118 = vmul.f32 1.0, %v1117
    %v1119 = vld [vmem:[%s1077 + $0x8] sm:$0xff]
    %1120 = vmatpush.msra.mxu0 %v120
    %1121 = vmatpush.msra.mxu0 %v119
    %1122 = vmatpush.msra.mxu0 %v118
    %1123 = vmatpush.msra.mxu0 %v117
    %1124 = vmatpush.msra.mxu0 %v116
    %1125 = vmatpush.msra.mxu0 %v115
    %1126 = vmatpush.msra.mxu0 %v114
    %1127 = vmatpush.msra.mxu0 %v113
    %1128 = vmatpush.msra.mxu0 %v112
    %1129 = vmatpush.msra.mxu0 %v111
    %1130 = vmatpush.msra.mxu0 %v110
    %1131 = vmatpush.msra.mxu0 %v109
    %1132 = vmatpush.msra.mxu0 %v108
    %1133 = vmatpush.msra.mxu0 %v107
    %1134 = vmatpush.msra.mxu0 %v106
    %1135 = vmatpush.msra.mxu0 %v105
    %1136 = vmatmul.f32.gmra.mxu0 %v1074
    %v1137 = vpop.f32.mrf.mxu0
    %v1138 = vadd.f32 0.0, %v1137
    %1139 = vdwg.mxu0
    %v1140 = vadd.f32 %v1119, %v1138
    %v1141 = vxor.u32 %v1140, 2147483648
    %v1142 = vmul.f32 %v1141, 1.442695
    %v1143 = vpow.pop %v1142
    %v1144 = vadd.f32 %v1143, 1.0
    %v1145 = vrcp.pop %v1144
    %v1146 = vmul.f32 %v1144, %v1145
    %v1147 = vsub.f32 1.0, %v1146
    %v1148 = vmul.f32 %v1145, %v1147
    %v1149 = vadd.f32 %v1145, %v1148
    %vm1150 = vweird.f32 %v1144
    %vm1151 = vweird.f32 %v1145
    %vm1152 = vmor %vm1150, %vm1151
    %v1153 = vsel %vm1152, %v1145, %v1149
    %v1154 = vand.u32 2147483647, %v1144
    %vm1155 = vcmp.eq.f32.partialorder %v1154, 8.507059e+37
    %v1156 = vand.u32 %v1144, 2147483648
    %v1157 = vor.u32 1.1754944e-38, %v1156
    %v1158 = vsel %vm1155, %v1157, %v1153
    %v1159 = vmul.f32 1.0, %v1158
    %v1160 = vld [vmem:[%s1077 + $0x10] sm:$0xff]
    %1161 = vmatpush.msra.mxu0 %v136
    %1162 = vmatpush.msra.mxu0 %v135
    %1163 = vmatpush.msra.mxu0 %v134
    %1164 = vmatpush.msra.mxu0 %v133
    %1165 = vmatpush.msra.mxu0 %v132
    %1166 = vmatpush.msra.mxu0 %v131
    %1167 = vmatpush.msra.mxu0 %v130
    %1168 = vmatpush.msra.mxu0 %v129
    %1169 = vmatpush.msra.mxu0 %v128
    %1170 = vmatpush.msra.mxu0 %v127
    %1171 = vmatpush.msra.mxu0 %v126
    %1172 = vmatpush.msra.mxu0 %v125
    %1173 = vmatpush.msra.mxu0 %v124
    %1174 = vmatpush.msra.mxu0 %v123
    %1175 = vmatpush.msra.mxu0 %v122
    %1176 = vmatpush.msra.mxu0 %v121
    %1177 = vmatmul.f32.gmra.mxu0 %v1074
    %v1178 = vpop.f32.mrf.mxu0
    %v1179 = vadd.f32 0.0, %v1178
    %1180 = vdwg.mxu0
    %v1181 = vadd.f32 %v1160, %v1179
    %v1182 = vtanh.pop %v1181
    %v1183 = vmul.f32 %v1159, %v1031
    %v1184 = vmul.f32 %v1118, %v1182
    %v1185 = vadd.f32 %v1183, %v1184
    %v1186 = vtanh.pop %v1185
    %v1187 = vld [vmem:[%s1077 + $0x18] sm:$0xff]
    %1188 = vmatpush.msra.mxu0 %v152
    %1189 = vmatpush.msra.mxu0 %v151
    %1190 = vmatpush.msra.mxu0 %v150
    %1191 = vmatpush.msra.mxu0 %v149
    %1192 = vmatpush.msra.mxu0 %v148
    %1193 = vmatpush.msra.mxu0 %v147
    %1194 = vmatpush.msra.mxu0 %v146
    %1195 = vmatpush.msra.mxu0 %v145
    %1196 = vmatpush.msra.mxu0 %v144
    %1197 = vmatpush.msra.mxu0 %v143
    %1198 = vmatpush.msra.mxu0 %v142
    %1199 = vmatpush.msra.mxu0 %v141
    %1200 = vmatpush.msra.mxu0 %v140
    %1201 = vmatpush.msra.mxu0 %v139
    %1202 = vmatpush.msra.mxu0 %v138
    %1203 = vmatpush.msra.mxu0 %v137
    %1204 = vmatmul.f32.gmra.mxu0 %v1074
    %v1205 = vpop.f32.mrf.mxu0
    %v1206 = vadd.f32 0.0, %v1205
    %1207 = vdwg.mxu0
    %v1208 = vadd.f32 %v1187, %v1206
    %v1209 = vxor.u32 %v1208, 2147483648
    %v1210 = vmul.f32 %v1209, 1.442695
    %v1211 = vpow.pop %v1210
    %v1212 = vadd.f32 %v1211, 1.0
    %v1213 = vrcp.pop %v1212
    %v1214 = vmul.f32 %v1212, %v1213
    %v1215 = vsub.f32 1.0, %v1214
    %v1216 = vmul.f32 %v1213, %v1215
    %v1217 = vadd.f32 %v1213, %v1216
    %vm1218 = vweird.f32 %v1212
    %vm1219 = vweird.f32 %v1213
    %vm1220 = vmor %vm1218, %vm1219
    %v1221 = vsel %vm1220, %v1213, %v1217
    %v1222 = vand.u32 2147483647, %v1212
    %vm1223 = vcmp.eq.f32.partialorder %v1222, 8.507059e+37
    %v1224 = vand.u32 %v1212, 2147483648
    %v1225 = vor.u32 1.1754944e-38, %v1224
    %v1226 = vsel %vm1223, %v1225, %v1221
    %v1227 = vmul.f32 1.0, %v1226
    %v1228 = vmul.f32 %v1227, %v1186
    %s1229 = scalar_lea.vmem [#allocation10], 48
    %1230 = vst [vmem:[%s1229] sm:$0xff] %v1228
    %s1231 = scalar_lea.vmem [#allocation2], 224
    %v1232 = vld [vmem:[%s1231] sm:$0xff]
    %1233 = vmatpush.msra.mxu0 %v104
    %1234 = vmatpush.msra.mxu0 %v103
    %1235 = vmatpush.msra.mxu0 %v102
    %1236 = vmatpush.msra.mxu0 %v101
    %1237 = vmatpush.msra.mxu0 %v100
    %1238 = vmatpush.msra.mxu0 %v99
    %1239 = vmatpush.msra.mxu0 %v98
    %1240 = vmatpush.msra.mxu0 %v97
    %1241 = vmatpush.msra.mxu0 %v96
    %1242 = vmatpush.msra.mxu0 %v95
    %1243 = vmatpush.msra.mxu0 %v94
    %1244 = vmatpush.msra.mxu0 %v93
    %1245 = vmatpush.msra.mxu0 %v92
    %1246 = vmatpush.msra.mxu0 %v91
    %1247 = vmatpush.msra.mxu0 %v90
    %1248 = vmatpush.msra.mxu0 %v89
    %1249 = vmatmul.f32.gmra.mxu0 %v1228
    %v1250 = vpop.f32.mrf.mxu0
    %v1251 = vadd.f32 0.0, %v1250
    %1252 = vdwg.mxu0
    %v1253 = vadd.f32 %v1232, %v1251
    %v1254 = vxor.u32 %v1253, 2147483648
    %v1255 = vmul.f32 %v1254, 1.442695
    %v1256 = vpow.pop %v1255
    %v1257 = vadd.f32 %v1256, 1.0
    %v1258 = vrcp.pop %v1257
    %v1259 = vmul.f32 %v1257, %v1258
    %v1260 = vsub.f32 1.0, %v1259
    %v1261 = vmul.f32 %v1258, %v1260
    %v1262 = vadd.f32 %v1258, %v1261
    %vm1263 = vweird.f32 %v1257
    %vm1264 = vweird.f32 %v1258
    %vm1265 = vmor %vm1263, %vm1264
    %v1266 = vsel %vm1265, %v1258, %v1262
    %v1267 = vand.u32 2147483647, %v1257
    %vm1268 = vcmp.eq.f32.partialorder %v1267, 8.507059e+37
    %v1269 = vand.u32 %v1257, 2147483648
    %v1270 = vor.u32 1.1754944e-38, %v1269
    %v1271 = vsel %vm1268, %v1270, %v1266
    %v1272 = vmul.f32 1.0, %v1271
    %v1273 = vld [vmem:[%s1231 + $0x8] sm:$0xff]
    %1274 = vmatpush.msra.mxu0 %v120
    %1275 = vmatpush.msra.mxu0 %v119
    %1276 = vmatpush.msra.mxu0 %v118
    %1277 = vmatpush.msra.mxu0 %v117
    %1278 = vmatpush.msra.mxu0 %v116
    %1279 = vmatpush.msra.mxu0 %v115
    %1280 = vmatpush.msra.mxu0 %v114
    %1281 = vmatpush.msra.mxu0 %v113
    %1282 = vmatpush.msra.mxu0 %v112
    %1283 = vmatpush.msra.mxu0 %v111
    %1284 = vmatpush.msra.mxu0 %v110
    %1285 = vmatpush.msra.mxu0 %v109
    %1286 = vmatpush.msra.mxu0 %v108
    %1287 = vmatpush.msra.mxu0 %v107
    %1288 = vmatpush.msra.mxu0 %v106
    %1289 = vmatpush.msra.mxu0 %v105
    %1290 = vmatmul.f32.gmra.mxu0 %v1228
    %v1291 = vpop.f32.mrf.mxu0
    %v1292 = vadd.f32 0.0, %v1291
    %1293 = vdwg.mxu0
    %v1294 = vadd.f32 %v1273, %v1292
    %v1295 = vxor.u32 %v1294, 2147483648
    %v1296 = vmul.f32 %v1295, 1.442695
    %v1297 = vpow.pop %v1296
    %v1298 = vadd.f32 %v1297, 1.0
    %v1299 = vrcp.pop %v1298
    %v1300 = vmul.f32 %v1298, %v1299
    %v1301 = vsub.f32 1.0, %v1300
    %v1302 = vmul.f32 %v1299, %v1301
    %v1303 = vadd.f32 %v1299, %v1302
    %vm1304 = vweird.f32 %v1298
    %vm1305 = vweird.f32 %v1299
    %vm1306 = vmor %vm1304, %vm1305
    %v1307 = vsel %vm1306, %v1299, %v1303
    %v1308 = vand.u32 2147483647, %v1298
    %vm1309 = vcmp.eq.f32.partialorder %v1308, 8.507059e+37
    %v1310 = vand.u32 %v1298, 2147483648
    %v1311 = vor.u32 1.1754944e-38, %v1310
    %v1312 = vsel %vm1309, %v1311, %v1307
    %v1313 = vmul.f32 1.0, %v1312
    %v1314 = vld [vmem:[%s1231 + $0x10] sm:$0xff]
    %1315 = vmatpush.msra.mxu0 %v136
    %1316 = vmatpush.msra.mxu0 %v135
    %1317 = vmatpush.msra.mxu0 %v134
    %1318 = vmatpush.msra.mxu0 %v133
    %1319 = vmatpush.msra.mxu0 %v132
    %1320 = vmatpush.msra.mxu0 %v131
    %1321 = vmatpush.msra.mxu0 %v130
    %1322 = vmatpush.msra.mxu0 %v129
    %1323 = vmatpush.msra.mxu0 %v128
    %1324 = vmatpush.msra.mxu0 %v127
    %1325 = vmatpush.msra.mxu0 %v126
    %1326 = vmatpush.msra.mxu0 %v125
    %1327 = vmatpush.msra.mxu0 %v124
    %1328 = vmatpush.msra.mxu0 %v123
    %1329 = vmatpush.msra.mxu0 %v122
    %1330 = vmatpush.msra.mxu0 %v121
    %1331 = vmatmul.f32.gmra.mxu0 %v1228
    %v1332 = vpop.f32.mrf.mxu0
    %v1333 = vadd.f32 0.0, %v1332
    %1334 = vdwg.mxu0
    %v1335 = vadd.f32 %v1314, %v1333
    %v1336 = vtanh.pop %v1335
    %v1337 = vmul.f32 %v1313, %v1185
    %v1338 = vmul.f32 %v1272, %v1336
    %v1339 = vadd.f32 %v1337, %v1338
    %v1340 = vtanh.pop %v1339
    %v1341 = vld [vmem:[%s1231 + $0x18] sm:$0xff]
    %1342 = vmatpush.msra.mxu0 %v152
    %1343 = vmatpush.msra.mxu0 %v151
    %1344 = vmatpush.msra.mxu0 %v150
    %1345 = vmatpush.msra.mxu0 %v149
    %1346 = vmatpush.msra.mxu0 %v148
    %1347 = vmatpush.msra.mxu0 %v147
    %1348 = vmatpush.msra.mxu0 %v146
    %1349 = vmatpush.msra.mxu0 %v145
    %1350 = vmatpush.msra.mxu0 %v144
    %1351 = vmatpush.msra.mxu0 %v143
    %1352 = vmatpush.msra.mxu0 %v142
    %1353 = vmatpush.msra.mxu0 %v141
    %1354 = vmatpush.msra.mxu0 %v140
    %1355 = vmatpush.msra.mxu0 %v139
    %1356 = vmatpush.msra.mxu0 %v138
    %1357 = vmatpush.msra.mxu0 %v137
    %1358 = vmatmul.f32.gmra.mxu0 %v1228
    %v1359 = vpop.f32.mrf.mxu0
    %v1360 = vadd.f32 0.0, %v1359
    %1361 = vdwg.mxu0
    %v1362 = vadd.f32 %v1341, %v1360
    %v1363 = vxor.u32 %v1362, 2147483648
    %v1364 = vmul.f32 %v1363, 1.442695
    %v1365 = vpow.pop %v1364
    %v1366 = vadd.f32 %v1365, 1.0
    %v1367 = vrcp.pop %v1366
    %v1368 = vmul.f32 %v1366, %v1367
    %v1369 = vsub.f32 1.0, %v1368
    %v1370 = vmul.f32 %v1367, %v1369
    %v1371 = vadd.f32 %v1367, %v1370
    %vm1372 = vweird.f32 %v1366
    %vm1373 = vweird.f32 %v1367
    %vm1374 = vmor %vm1372, %vm1373
    %v1375 = vsel %vm1374, %v1367, %v1371
    %v1376 = vand.u32 2147483647, %v1366
    %vm1377 = vcmp.eq.f32.partialorder %v1376, 8.507059e+37
    %v1378 = vand.u32 %v1366, 2147483648
    %v1379 = vor.u32 1.1754944e-38, %v1378
    %v1380 = vsel %vm1377, %v1379, %v1375
    %v1381 = vmul.f32 1.0, %v1380
    %v1382 = vmul.f32 %v1381, %v1340
    %s1383 = scalar_lea.vmem [#allocation10], 56
    %1384 = vst [vmem:[%s1383] sm:$0xff] %v1382
    %1385 = vst [vmem:[#allocation11] sm:$0xff] %v1382
    %1386 = vst [vmem:[#allocation13] sm:$0xff] %v1339
    // Predicated region
    $region38: #{tpu_custom_call.1} parent=1 // pred_check
      _
    $region39: #{tpu_custom_call.1} parent=1 // pred_check_branch
      %1388 = sbr.rel (0) target = $region41
    $region40: #{tpu_custom_call.1} parent=1 // pred_region
      %1390 = vsyncadd [#allocation4], 0
      %s1391 = sshll.u32 [#allocation10], 4
      %s1392 = int_to_ptr.vmem [resolvable:$true] %s1391
      %s1393 = sshll.u32 %s4, 4
      %s1394 = int_to_ptr.hbm [resolvable:$true] %s1393
      %1399 = dma.vmem_to_hbm [thread:$0]  %s1392, 1024, %s1394, [#allocation4], 128, 128, 8
    $region41: #{tpu_custom_call.1} parent=1 // pred_fallthru
      _
    // Predicated region
    $region42: #{tpu_custom_call.1} parent=1 // pred_check
      _
    $region43: #{tpu_custom_call.1} parent=1 // pred_check_branch
      %1401 = sbr.rel (0) target = $region45
    $region44: #{tpu_custom_call.1} parent=1 // pred_region
      %1403 = vsyncadd [#allocation12], 0
      %s1405 = sshll.u32 [#allocation11], 4
      %s1406 = int_to_ptr.vmem [resolvable:$true] %s1405
      %s1407 = sshll.u32 %s5, 4
      %s1408 = int_to_ptr.hbm [resolvable:$true] %s1407
      %1410 = dma.vmem_to_hbm [thread:$0]  %s1406, 128, %s1408, [#allocation12]
    $region45: #{tpu_custom_call.1} parent=1 // pred_fallthru
      _
    // Predicated region
    $region46: #{tpu_custom_call.1} parent=1 // pred_check
      _
    $region47: #{tpu_custom_call.1} parent=1 // pred_check_branch
      %1412 = sbr.rel (0) target = $region49
    $region48: #{tpu_custom_call.1} parent=1 // pred_region
      %1414 = vsyncadd [#allocation12], 0
      %s1416 = sshll.u32 [#allocation13], 4
      %s1417 = int_to_ptr.vmem [resolvable:$true] %s1416
      %s1418 = sshll.u32 %s6, 4
      %s1419 = int_to_ptr.hbm [resolvable:$true] %s1418
      %1421 = dma.vmem_to_hbm [thread:$0]  %s1417, 128, %s1419, [#allocation12]
    $region49: #{tpu_custom_call.1} parent=1 // pred_fallthru
      _
    // Predicated region
    $region50: #{tpu_custom_call.1} parent=1 // pred_check
      _
    $region51: #{tpu_custom_call.1} parent=1 // pred_check_branch
      %1423 = sbr.rel (0) target = $region53
    $region52: #{tpu_custom_call.1} parent=1 // pred_region
      %1425 = dma.done [#allocation4], 1024
    $region53: #{tpu_custom_call.1} parent=1 // pred_fallthru
      _
    // Predicated region
    $region54: #{tpu_custom_call.1} parent=1 // pred_check
      _
    $region55: #{tpu_custom_call.1} parent=1 // pred_check_branch
      %1427 = sbr.rel (0) target = $region57
    $region56: #{tpu_custom_call.1} parent=1 // pred_region
      %1429 = dma.done [#allocation12], 128
    $region57: #{tpu_custom_call.1} parent=1 // pred_fallthru
      _
    // Predicated region
    $region58: #{tpu_custom_call.1} parent=1 // pred_check
      _
    $region59: #{tpu_custom_call.1} parent=1 // pred_check_branch
      %1431 = sbr.rel (0) target = $region61
    $region60: #{tpu_custom_call.1} parent=1 // pred_region
      %1433 = dma.done [#allocation12], 128
    $region61: #{tpu_custom_call.1} parent=1 // pred_fallthru
      _
    %1434 = vsyncpa [#allocation3], 1
    %1435 = vsyncpa [#allocation6], 1
    %1436 = vsyncpa [#allocation9], 1
    %1437 = vsyncpa [#allocation4], 1
    %1438 = vsyncpa [#allocation12], 1

</llo_original>
